<compile_context>
chip_gen: v5e
topology: v5e:2x2
jax: 0.10.0
libtpu: 0.0.40
codegen_flags: <defaults>
</compile_context>

<pallas_src>
import functools

import jax
import jax.numpy as jnp
import numpy as np
from jax.experimental import pallas as pl
from jax.experimental.pallas import tpu as pltpu

_BN_EPS = 1e-5
_LANE = 128
_KS = (3, 3, 3, 3, 4)      # conv-transpose kernel sizes
_PADS = (1, 1, 1, 1, 0)    # conv-transpose paddings
_OUT_CH = 239              # real channel count of the final layer


def _round_up(x, m):
    return (x + m - 1) // m * m


# ------------------------------ fused kernel ---------------------------------
def _generator_kernel(x_ref,
                      w1_ref, g1_ref, b1_ref,
                      w2_ref, g2_ref, b2_ref,
                      w3_ref, g3_ref, b3_ref,
                      w4_ref, g4_ref, b4_ref,
                      w5_ref,
                      out_ref,
                      a1_ref, a2_ref, a3_ref, a4_ref,
                      *, L):
    """Whole Generator forward, VMEM-resident, channels-last.

    x_ref : (N, L+2, C0p)   length- and channel-padded input, f32
    wi_ref: (Ki*Cinp, Coutp) k-flipped, lane-padded weights, bf16
    gi/bi : (1, Coutp)      BN scale/shift (zero in padded channels), f32
    out   : (N, L+3, C5p)   tanh output (channel-padded), f32
    ai    : halo-padded activation scratch of layer i, f32
    """
    N = x_ref.shape[0]

    def conv_mm(a_ref, w_ref, K, L_out):
        # One matmul per layer: im2col LHS (N*L_out, K*Cin) @ W (K*Cin, Cout).
        parts = []
        for n in range(N):                                # N tiny & static -> unrolled
            taps = [a_ref[n, k:k + L_out, :] for k in range(K)]
            parts.append(jnp.concatenate(taps, axis=1))   # (L_out, K*Cin), 128-aligned chunks
        lhs = jnp.concatenate(parts, axis=0)              # (N*L_out, K*Cin)
        return jnp.dot(lhs.astype(jnp.bfloat16), w_ref[...],
                       preferred_element_type=jnp.float32)

    def bn_relu_store(y, g_ref, b_ref, dst_ref, L_out, halo):
        # Training-mode BatchNorm1d: batch stats over (N, L_out), biased var,
        # single pass (E[x^2] - mean^2).  Elementwise math kept in f32.
        inv = 1.0 / float(N * L_out)
        mean = jnp.sum(y, axis=0, keepdims=True) * inv
        var = jnp.sum(y * y, axis=0, keepdims=True) * inv - mean * mean
        scale = g_ref[...] * jax.lax.rsqrt(var + _BN_EPS)
        shift = b_ref[...] - mean * scale
        act = jnp.maximum(y * scale + shift, 0.0)
        dst_ref[...] = jnp.zeros_like(dst_ref)            # zero the halo rows
        for n in range(N):
            dst_ref[n, halo:halo + L_out, :] = act[n * L_out:(n + 1) * L_out, :]

    # Layers 1..4: ConvTranspose1d(K=3, pad=1) + BN + ReLU   (L_out == L)
    y = conv_mm(x_ref, w1_ref, 3, L)
    bn_relu_store(y, g1_ref, b1_ref, a1_ref, L, 1)
    y = conv_mm(a1_ref, w2_ref, 3, L)
    bn_relu_store(y, g2_ref, b2_ref, a2_ref, L, 1)
    y = conv_mm(a2_ref, w3_ref, 3, L)
    bn_relu_store(y, g3_ref, b3_ref, a3_ref, L, 1)
    y = conv_mm(a3_ref, w4_ref, 3, L)
    bn_relu_store(y, g4_ref, b4_ref, a4_ref, L, 3)        # halo 3 for next layer (K=4, pad=0)

    # Layer 5: ConvTranspose1d(K=4, pad=0) + Tanh   (L_out == L + 3)
    L5 = L + 3
    y = jnp.tanh(conv_mm(a4_ref, w5_ref, 4, L5))
    for n in range(N):
        out_ref[n, :, :] = y[n * L5:(n + 1) * L5, :]


# ------------------------------ parameters -----------------------------------
def init_generator_params(key, latent_dim, ngf=32):
    """PyTorch-layout params: ConvTranspose1d weight (Cin, Cout, K), BN gamma/beta."""
    dims = [latent_dim, ngf * 8, ngf * 4, ngf * 2, ngf, _OUT_CH]
    params = []
    for i in range(5):
        key, sub = jax.random.split(key)
        w = 0.05 * jax.random.normal(sub, (dims[i], dims[i + 1], _KS[i]), jnp.float32)
        gamma = jnp.ones((dims[i + 1],), jnp.float32)   # BN weight init
        beta = jnp.zeros((dims[i + 1],), jnp.float32)   # BN bias init
        params.append((w, gamma, beta))
    return params


def prepare_generator_params(params):
    """One-time prep: k-flip, reorder to (K,Cin,Cout), lane-pad channels to a
    multiple of 128, flatten to (K*Cin_pad, Cout_pad) and cast to bf16.
    BN gamma/beta are lane-padded with zeros.  Returns a flat tuple of arrays."""
    flat = []
    for i, (w, gamma, beta) in enumerate(params):
        Cin, Cout, K = w.shape
        cin_p = _round_up(Cin, _LANE)
        cout_p = _round_up(Cout, _LANE)
        wk = jnp.transpose(w[:, :, ::-1], (2, 0, 1))                    # (K, Cin, Cout)
        wk = jnp.pad(wk, ((0, 0), (0, cin_p - Cin), (0, cout_p - Cout)))
        flat.append(wk.reshape(K * cin_p, cout_p).astype(jnp.bfloat16))
        if i < 4:                                                       # last layer has no BN
            flat.append(jnp.pad(gamma, (0, cout_p - Cout)).reshape(1, cout_p).astype(jnp.float32))
            flat.append(jnp.pad(beta, (0, cout_p - Cout)).reshape(1, cout_p).astype(jnp.float32))
    return tuple(flat)


# ------------------------------- forward -------------------------------------
def generator_forward(x_ncl, flat):
    """x_ncl: (N, latent_dim, L)  ->  (N, 239, L+3)   (PyTorch NCL layout)."""
    (w1, g1, b1, w2, g2, b2, w3, g3, b3, w4, g4, b4, w5) = flat
    N, C0, L = x_ncl.shape
    c0_p = w1.shape[0] // _KS[0]
    c1, c2, c3, c4 = w1.shape[1], w2.shape[1], w3.shape[1], w4.shape[1]
    c5_p = w5.shape[1]

    # NCL -> NLC, zero-pad the length halo (K=3, p=1 -> 1 per side) and the
    # channel dim up to a lane multiple.
    x = jnp.transpose(x_ncl, (0, 2, 1)).astype(jnp.float32)
    x = jnp.pad(x, ((0, 0), (1, 1), (0, c0_p - C0)))

    out = pl.pallas_call(
        functools.partial(_generator_kernel, L=L),
        out_shape=jax.ShapeDtypeStruct((N, L + 3, c5_p), jnp.float32),
        in_specs=[pl.BlockSpec(memory_space=pltpu.MemorySpace.VMEM)] * 14,
        out_specs=pl.BlockSpec(memory_space=pltpu.MemorySpace.VMEM),
        scratch_shapes=[
            pltpu.VMEM((N, L + 2, c1), jnp.float32),   # layer-1 act (halo 1)
            pltpu.VMEM((N, L + 2, c2), jnp.float32),   # layer-2 act (halo 1)
            pltpu.VMEM((N, L + 2, c3), jnp.float32),   # layer-3 act (halo 1)
            pltpu.VMEM((N, L + 6, c4), jnp.float32),   # layer-4 act (halo 3)
        ],
    )(x, w1, g1, b1, w2, g2, b2, w3, g3, b3, w4, g4, b4, w5)

    out = out[:, :, :_OUT_CH]                  # drop lane padding (256 -> 239)
    return jnp.transpose(out, (0, 2, 1))       # NLC -> NCL


# ------------------------- pure-JAX reference (check) ------------------------
def _ref_layer(x_ncl, w_pt, gamma, beta, padding, mode):
    Cin, Cout, K = w_pt.shape
    pad = K - 1 - padding
    x = jnp.transpose(x_ncl, (0, 2, 1))
    x = jnp.pad(x, ((0, 0), (pad, pad), (0, 0)))
    wk = jnp.transpose(w_pt[:, :, ::-1], (2, 0, 1))
    L_out = x.shape[1] - K + 1
    y = sum(jnp.einsum("nlc,cd->nld", x[:, k:k + L_out, :], wk[k]) for k in range(K))
    if mode == "bn_relu":
        mean = y.mean(axis=(0, 1), keepdims=True)
        var = ((y - mean) ** 2).mean(axis=(0, 1), keepdims=True)
        y = jnp.maximum((y - mean) * jax.lax.rsqrt(var + _BN_EPS) * gamma + beta, 0.0)
    else:
        y = jnp.tanh(y)
    return jnp.transpose(y, (0, 2, 1))


def generator_ref(x, params):
    h = x
    for i, (w, gamma, beta) in enumerate(params):
        mode = "bn_relu" if i < 4 else "tanh"
        h = _ref_layer(h, w, gamma, beta, _PADS[i], mode)
    return h


# --------------------------------- main ---------------------------------------
if __name__ == "__main__":
    latent_dim, ngf = 16, 32
    batch, seq = 2, 8

    key = jax.random.PRNGKey(0)
    key, kx = jax.random.split(key)
    x = jax.random.normal(kx, (batch, latent_dim, seq), jnp.float32)   # NCL

    params = init_generator_params(key, latent_dim, ngf)
    flat = prepare_generator_params(params)        # one-time weight prep (k-flip/pad/bf16)

    fwd = jax.jit(generator_forward)
    out = jax.block_until_ready(fwd(x, flat))

    assert out.shape == (batch, _OUT_CH, seq + 3), out.shape

    ref = jax.block_until_ready(generator_ref(x, params))
    # bf16 matmul operands (f32 accumulation) -> ~1e-3-level deltas vs f32 ref.
    np.testing.assert_allclose(np.asarray(out), np.asarray(ref), rtol=2e-2, atol=2e-2)

    print("KERNEL_OK")
</pallas_src>

<mosaic_0001>
module attributes {stable_mosaic.version = 11 : i64} {
  func.func @_generator_kernel(%arg0: memref<2x10x128xf32, #tpu.memory_space<vmem>>, %arg1: memref<384x256xbf16, #tpu.memory_space<vmem>>, %arg2: memref<1x256xf32, #tpu.memory_space<vmem>>, %arg3: memref<1x256xf32, #tpu.memory_space<vmem>>, %arg4: memref<768x128xbf16, #tpu.memory_space<vmem>>, %arg5: memref<1x128xf32, #tpu.memory_space<vmem>>, %arg6: memref<1x128xf32, #tpu.memory_space<vmem>>, %arg7: memref<384x128xbf16, #tpu.memory_space<vmem>>, %arg8: memref<1x128xf32, #tpu.memory_space<vmem>>, %arg9: memref<1x128xf32, #tpu.memory_space<vmem>>, %arg10: memref<384x128xbf16, #tpu.memory_space<vmem>>, %arg11: memref<1x128xf32, #tpu.memory_space<vmem>>, %arg12: memref<1x128xf32, #tpu.memory_space<vmem>>, %arg13: memref<512x256xbf16, #tpu.memory_space<vmem>>, %arg14: memref<2x11x256xf32, #tpu.memory_space<vmem>>, %arg15: memref<2x10x256xf32, #tpu.memory_space<vmem>>, %arg16: memref<2x10x128xf32, #tpu.memory_space<vmem>>, %arg17: memref<2x10x128xf32, #tpu.memory_space<vmem>>, %arg18: memref<2x14x128xf32, #tpu.memory_space<vmem>>) attributes {dimension_semantics = [], scalar_prefetch = 0 : i64, scratch_operands = 4 : i64, tpu.core_type = #tpu.core_type<tc>} {
    %c0 = arith.constant 0 : index
    %c0_0 = arith.constant 0 : index
    %c0_1 = arith.constant 0 : index
    %0 = vector.load %arg0[%c0, %c0_0, %c0_1] : memref<2x10x128xf32, #tpu.memory_space<vmem>>, vector<1x8x128xf32>
    %1 = vector.shape_cast %0 : vector<1x8x128xf32> to vector<8x128xf32>
    %c0_2 = arith.constant 0 : index
    %c1 = arith.constant 1 : index
    %c0_3 = arith.constant 0 : index
    %2 = vector.load %arg0[%c0_2, %c1, %c0_3] : memref<2x10x128xf32, #tpu.memory_space<vmem>>, vector<1x8x128xf32>
    %3 = vector.shape_cast %2 : vector<1x8x128xf32> to vector<8x128xf32>
    %c0_4 = arith.constant 0 : index
    %c2 = arith.constant 2 : index
    %c0_5 = arith.constant 0 : index
    %4 = vector.load %arg0[%c0_4, %c2, %c0_5] : memref<2x10x128xf32, #tpu.memory_space<vmem>>, vector<1x8x128xf32>
    %5 = vector.shape_cast %4 : vector<1x8x128xf32> to vector<8x128xf32>
    %6 = tpu.concatenate %1, %3, %5 in 1 : vector<8x128xf32>, vector<8x128xf32>, vector<8x128xf32> -> vector<8x384xf32>
    %c1_6 = arith.constant 1 : index
    %c0_7 = arith.constant 0 : index
    %c0_8 = arith.constant 0 : index
    %7 = vector.load %arg0[%c1_6, %c0_7, %c0_8] : memref<2x10x128xf32, #tpu.memory_space<vmem>>, vector<1x8x128xf32>
    %8 = vector.shape_cast %7 : vector<1x8x128xf32> to vector<8x128xf32>
    %c1_9 = arith.constant 1 : index
    %c1_10 = arith.constant 1 : index
    %c0_11 = arith.constant 0 : index
    %9 = vector.load %arg0[%c1_9, %c1_10, %c0_11] : memref<2x10x128xf32, #tpu.memory_space<vmem>>, vector<1x8x128xf32>
    %10 = vector.shape_cast %9 : vector<1x8x128xf32> to vector<8x128xf32>
    %c1_12 = arith.constant 1 : index
    %c2_13 = arith.constant 2 : index
    %c0_14 = arith.constant 0 : index
    %11 = vector.load %arg0[%c1_12, %c2_13, %c0_14] : memref<2x10x128xf32, #tpu.memory_space<vmem>>, vector<1x8x128xf32>
    %12 = vector.shape_cast %11 : vector<1x8x128xf32> to vector<8x128xf32>
    %13 = tpu.concatenate %8, %10, %12 in 1 : vector<8x128xf32>, vector<8x128xf32>, vector<8x128xf32> -> vector<8x384xf32>
    %14 = tpu.concatenate %6, %13 in 0 : vector<8x384xf32>, vector<8x384xf32> -> vector<16x384xf32>
    %15 = arith.truncf %14 : vector<16x384xf32> to vector<16x384xbf16>
    %c0_15 = arith.constant 0 : index
    %c0_16 = arith.constant 0 : index
    %16 = vector.load %arg1[%c0_15, %c0_16] : memref<384x256xbf16, #tpu.memory_space<vmem>>, vector<384x256xbf16>
    %cst = arith.constant dense<0.000000e+00> : vector<16x256xf32>
    %17 = tpu.matmul %15, %16, %cst {dimension_numbers = #tpu.dot_dimension_numbers<[1], [0], [0], [1], [0, 0, 1, 1], [], []>} : vector<16x384xbf16>, vector<384x256xbf16>, vector<16x256xf32> -> vector<16x256xf32>
    %cst_17 = arith.constant dense<0.000000e+00> : vector<256xf32>
    %18 = vector.multi_reduction <add>, %17, %cst_17 [0] : vector<16x256xf32> to vector<256xf32>
    %19 = vector.shape_cast %18 : vector<256xf32> to vector<1x256xf32>
    %cst_18 = arith.constant 6.250000e-02 : f32
    %20 = vector.broadcast %cst_18 : f32 to vector<1x256xf32>
    %21 = arith.mulf %19, %20 : vector<1x256xf32>
    %22 = arith.mulf %17, %17 : vector<16x256xf32>
    %cst_19 = arith.constant dense<0.000000e+00> : vector<256xf32>
    %23 = vector.multi_reduction <add>, %22, %cst_19 [0] : vector<16x256xf32> to vector<256xf32>
    %24 = vector.shape_cast %23 : vector<256xf32> to vector<1x256xf32>
    %cst_20 = arith.constant 6.250000e-02 : f32
    %25 = vector.broadcast %cst_20 : f32 to vector<1x256xf32>
    %26 = arith.mulf %24, %25 : vector<1x256xf32>
    %27 = arith.mulf %21, %21 : vector<1x256xf32>
    %28 = arith.subf %26, %27 : vector<1x256xf32>
    %c0_21 = arith.constant 0 : index
    %c0_22 = arith.constant 0 : index
    %29 = vector.load %arg2[%c0_21, %c0_22] : memref<1x256xf32, #tpu.memory_space<vmem>>, vector<1x256xf32>
    %cst_23 = arith.constant 9.99999974E-6 : f32
    %30 = vector.broadcast %cst_23 : f32 to vector<1x256xf32>
    %31 = arith.addf %28, %30 : vector<1x256xf32>
    %32 = math.rsqrt %31 : vector<1x256xf32>
    %33 = arith.mulf %29, %32 : vector<1x256xf32>
    %c0_24 = arith.constant 0 : index
    %c0_25 = arith.constant 0 : index
    %34 = vector.load %arg3[%c0_24, %c0_25] : memref<1x256xf32, #tpu.memory_space<vmem>>, vector<1x256xf32>
    %35 = arith.mulf %21, %33 : vector<1x256xf32>
    %36 = arith.subf %34, %35 : vector<1x256xf32>
    %37 = vector.broadcast %33 : vector<1x256xf32> to vector<16x256xf32>
    %38 = arith.mulf %17, %37 : vector<16x256xf32>
    %39 = vector.broadcast %36 : vector<1x256xf32> to vector<16x256xf32>
    %40 = arith.addf %38, %39 : vector<16x256xf32>
    %cst_26 = arith.constant 0.000000e+00 : f32
    %41 = vector.broadcast %cst_26 : f32 to vector<16x256xf32>
    %42 = arith.maximumf %40, %41 : vector<16x256xf32>
    %cst_27 = arith.constant 0.000000e+00 : f32
    %43 = vector.broadcast %cst_27 : f32 to vector<2x10x256xf32>
    %c0_28 = arith.constant 0 : index
    %c0_29 = arith.constant 0 : index
    %c0_30 = arith.constant 0 : index
    %44 = vector.load %arg15[%c0_28, %c0_29, %c0_30] : memref<2x10x256xf32, #tpu.memory_space<vmem>>, vector<2x10x256xf32>
    tpu.vector_store %arg15[%c0_28, %c0_29, %c0_30], %43 {strides = array<i32>} : memref<2x10x256xf32, #tpu.memory_space<vmem>>, vector<2x10x256xf32>,
    %45 = vector.extract_strided_slice %42 {offsets = [0, 0], sizes = [8, 256], strides = [1, 1]} : vector<16x256xf32> to vector<8x256xf32>
    %c0_31 = arith.constant 0 : index
    %c1_32 = arith.constant 1 : index
    %c0_33 = arith.constant 0 : index
    %46 = vector.load %arg15[%c0_31, %c1_32, %c0_33] : memref<2x10x256xf32, #tpu.memory_space<vmem>>, vector<1x8x256xf32>
    %47 = vector.shape_cast %46 : vector<1x8x256xf32> to vector<8x256xf32>
    %48 = vector.shape_cast %45 : vector<8x256xf32> to vector<1x8x256xf32>
    tpu.vector_store %arg15[%c0_31, %c1_32, %c0_33], %48 {strides = array<i32>} : memref<2x10x256xf32, #tpu.memory_space<vmem>>, vector<1x8x256xf32>,
    %49 = vector.extract_strided_slice %42 {offsets = [8, 0], sizes = [8, 256], strides = [1, 1]} : vector<16x256xf32> to vector<8x256xf32>
    %c1_34 = arith.constant 1 : index
    %c1_35 = arith.constant 1 : index
    %c0_36 = arith.constant 0 : index
    %50 = vector.load %arg15[%c1_34, %c1_35, %c0_36] : memref<2x10x256xf32, #tpu.memory_space<vmem>>, vector<1x8x256xf32>
    %51 = vector.shape_cast %50 : vector<1x8x256xf32> to vector<8x256xf32>
    %52 = vector.shape_cast %49 : vector<8x256xf32> to vector<1x8x256xf32>
    tpu.vector_store %arg15[%c1_34, %c1_35, %c0_36], %52 {strides = array<i32>} : memref<2x10x256xf32, #tpu.memory_space<vmem>>, vector<1x8x256xf32>,
    %c0_37 = arith.constant 0 : index
    %c0_38 = arith.constant 0 : index
    %c0_39 = arith.constant 0 : index
    %53 = vector.load %arg15[%c0_37, %c0_38, %c0_39] : memref<2x10x256xf32, #tpu.memory_space<vmem>>, vector<1x8x256xf32>
    %54 = vector.shape_cast %53 : vector<1x8x256xf32> to vector<8x256xf32>
    %c0_40 = arith.constant 0 : index
    %c1_41 = arith.constant 1 : index
    %c0_42 = arith.constant 0 : index
    %55 = vector.load %arg15[%c0_40, %c1_41, %c0_42] : memref<2x10x256xf32, #tpu.memory_space<vmem>>, vector<1x8x256xf32>
    %56 = vector.shape_cast %55 : vector<1x8x256xf32> to vector<8x256xf32>
    %c0_43 = arith.constant 0 : index
    %c2_44 = arith.constant 2 : index
    %c0_45 = arith.constant 0 : index
    %57 = vector.load %arg15[%c0_43, %c2_44, %c0_45] : memref<2x10x256xf32, #tpu.memory_space<vmem>>, vector<1x8x256xf32>
    %58 = vector.shape_cast %57 : vector<1x8x256xf32> to vector<8x256xf32>
    %59 = tpu.concatenate %54, %56, %58 in 1 : vector<8x256xf32>, vector<8x256xf32>, vector<8x256xf32> -> vector<8x768xf32>
    %c1_46 = arith.constant 1 : index
    %c0_47 = arith.constant 0 : index
    %c0_48 = arith.constant 0 : index
    %60 = vector.load %arg15[%c1_46, %c0_47, %c0_48] : memref<2x10x256xf32, #tpu.memory_space<vmem>>, vector<1x8x256xf32>
    %61 = vector.shape_cast %60 : vector<1x8x256xf32> to vector<8x256xf32>
    %c1_49 = arith.constant 1 : index
    %c1_50 = arith.constant 1 : index
    %c0_51 = arith.constant 0 : index
    %62 = vector.load %arg15[%c1_49, %c1_50, %c0_51] : memref<2x10x256xf32, #tpu.memory_space<vmem>>, vector<1x8x256xf32>
    %63 = vector.shape_cast %62 : vector<1x8x256xf32> to vector<8x256xf32>
    %c1_52 = arith.constant 1 : index
    %c2_53 = arith.constant 2 : index
    %c0_54 = arith.constant 0 : index
    %64 = vector.load %arg15[%c1_52, %c2_53, %c0_54] : memref<2x10x256xf32, #tpu.memory_space<vmem>>, vector<1x8x256xf32>
    %65 = vector.shape_cast %64 : vector<1x8x256xf32> to vector<8x256xf32>
    %66 = tpu.concatenate %61, %63, %65 in 1 : vector<8x256xf32>, vector<8x256xf32>, vector<8x256xf32> -> vector<8x768xf32>
    %67 = tpu.concatenate %59, %66 in 0 : vector<8x768xf32>, vector<8x768xf32> -> vector<16x768xf32>
    %68 = arith.truncf %67 : vector<16x768xf32> to vector<16x768xbf16>
    %c0_55 = arith.constant 0 : index
    %c0_56 = arith.constant 0 : index
    %69 = vector.load %arg4[%c0_55, %c0_56] : memref<768x128xbf16, #tpu.memory_space<vmem>>, vector<768x128xbf16>
    %cst_57 = arith.constant dense<0.000000e+00> : vector<16x128xf32>
    %70 = tpu.matmul %68, %69, %cst_57 {dimension_numbers = #tpu.dot_dimension_numbers<[1], [0], [0], [1], [0, 0, 1, 1], [], []>} : vector<16x768xbf16>, vector<768x128xbf16>, vector<16x128xf32> -> vector<16x128xf32>
    %cst_58 = arith.constant dense<0.000000e+00> : vector<128xf32>
    %71 = vector.multi_reduction <add>, %70, %cst_58 [0] : vector<16x128xf32> to vector<128xf32>
    %72 = vector.shape_cast %71 : vector<128xf32> to vector<1x128xf32>
    %cst_59 = arith.constant 6.250000e-02 : f32
    %73 = vector.broadcast %cst_59 : f32 to vector<1x128xf32>
    %74 = arith.mulf %72, %73 : vector<1x128xf32>
    %75 = arith.mulf %70, %70 : vector<16x128xf32>
    %cst_60 = arith.constant dense<0.000000e+00> : vector<128xf32>
    %76 = vector.multi_reduction <add>, %75, %cst_60 [0] : vector<16x128xf32> to vector<128xf32>
    %77 = vector.shape_cast %76 : vector<128xf32> to vector<1x128xf32>
    %cst_61 = arith.constant 6.250000e-02 : f32
    %78 = vector.broadcast %cst_61 : f32 to vector<1x128xf32>
    %79 = arith.mulf %77, %78 : vector<1x128xf32>
    %80 = arith.mulf %74, %74 : vector<1x128xf32>
    %81 = arith.subf %79, %80 : vector<1x128xf32>
    %c0_62 = arith.constant 0 : index
    %c0_63 = arith.constant 0 : index
    %82 = vector.load %arg5[%c0_62, %c0_63] : memref<1x128xf32, #tpu.memory_space<vmem>>, vector<1x128xf32>
    %cst_64 = arith.constant 9.99999974E-6 : f32
    %83 = vector.broadcast %cst_64 : f32 to vector<1x128xf32>
    %84 = arith.addf %81, %83 : vector<1x128xf32>
    %85 = math.rsqrt %84 : vector<1x128xf32>
    %86 = arith.mulf %82, %85 : vector<1x128xf32>
    %c0_65 = arith.constant 0 : index
    %c0_66 = arith.constant 0 : index
    %87 = vector.load %arg6[%c0_65, %c0_66] : memref<1x128xf32, #tpu.memory_space<vmem>>, vector<1x128xf32>
    %88 = arith.mulf %74, %86 : vector<1x128xf32>
    %89 = arith.subf %87, %88 : vector<1x128xf32>
    %90 = vector.broadcast %86 : vector<1x128xf32> to vector<16x128xf32>
    %91 = arith.mulf %70, %90 : vector<16x128xf32>
    %92 = vector.broadcast %89 : vector<1x128xf32> to vector<16x128xf32>
    %93 = arith.addf %91, %92 : vector<16x128xf32>
    %cst_67 = arith.constant 0.000000e+00 : f32
    %94 = vector.broadcast %cst_67 : f32 to vector<16x128xf32>
    %95 = arith.maximumf %93, %94 : vector<16x128xf32>
    %cst_68 = arith.constant 0.000000e+00 : f32
    %96 = vector.broadcast %cst_68 : f32 to vector<2x10x128xf32>
    %c0_69 = arith.constant 0 : index
    %c0_70 = arith.constant 0 : index
    %c0_71 = arith.constant 0 : index
    %97 = vector.load %arg16[%c0_69, %c0_70, %c0_71] : memref<2x10x128xf32, #tpu.memory_space<vmem>>, vector<2x10x128xf32>
    tpu.vector_store %arg16[%c0_69, %c0_70, %c0_71], %96 {strides = array<i32>} : memref<2x10x128xf32, #tpu.memory_space<vmem>>, vector<2x10x128xf32>,
    %98 = vector.extract_strided_slice %95 {offsets = [0, 0], sizes = [8, 128], strides = [1, 1]} : vector<16x128xf32> to vector<8x128xf32>
    %c0_72 = arith.constant 0 : index
    %c1_73 = arith.constant 1 : index
    %c0_74 = arith.constant 0 : index
    %99 = vector.load %arg16[%c0_72, %c1_73, %c0_74] : memref<2x10x128xf32, #tpu.memory_space<vmem>>, vector<1x8x128xf32>
    %100 = vector.shape_cast %99 : vector<1x8x128xf32> to vector<8x128xf32>
    %101 = vector.shape_cast %98 : vector<8x128xf32> to vector<1x8x128xf32>
    tpu.vector_store %arg16[%c0_72, %c1_73, %c0_74], %101 {strides = array<i32>} : memref<2x10x128xf32, #tpu.memory_space<vmem>>, vector<1x8x128xf32>,
    %102 = vector.extract_strided_slice %95 {offsets = [8, 0], sizes = [8, 128], strides = [1, 1]} : vector<16x128xf32> to vector<8x128xf32>
    %c1_75 = arith.constant 1 : index
    %c1_76 = arith.constant 1 : index
    %c0_77 = arith.constant 0 : index
    %103 = vector.load %arg16[%c1_75, %c1_76, %c0_77] : memref<2x10x128xf32, #tpu.memory_space<vmem>>, vector<1x8x128xf32>
    %104 = vector.shape_cast %103 : vector<1x8x128xf32> to vector<8x128xf32>
    %105 = vector.shape_cast %102 : vector<8x128xf32> to vector<1x8x128xf32>
    tpu.vector_store %arg16[%c1_75, %c1_76, %c0_77], %105 {strides = array<i32>} : memref<2x10x128xf32, #tpu.memory_space<vmem>>, vector<1x8x128xf32>,
    %c0_78 = arith.constant 0 : index
    %c0_79 = arith.constant 0 : index
    %c0_80 = arith.constant 0 : index
    %106 = vector.load %arg16[%c0_78, %c0_79, %c0_80] : memref<2x10x128xf32, #tpu.memory_space<vmem>>, vector<1x8x128xf32>
    %107 = vector.shape_cast %106 : vector<1x8x128xf32> to vector<8x128xf32>
    %c0_81 = arith.constant 0 : index
    %c1_82 = arith.constant 1 : index
    %c0_83 = arith.constant 0 : index
    %108 = vector.load %arg16[%c0_81, %c1_82, %c0_83] : memref<2x10x128xf32, #tpu.memory_space<vmem>>, vector<1x8x128xf32>
    %109 = vector.shape_cast %108 : vector<1x8x128xf32> to vector<8x128xf32>
    %c0_84 = arith.constant 0 : index
    %c2_85 = arith.constant 2 : index
    %c0_86 = arith.constant 0 : index
    %110 = vector.load %arg16[%c0_84, %c2_85, %c0_86] : memref<2x10x128xf32, #tpu.memory_space<vmem>>, vector<1x8x128xf32>
    %111 = vector.shape_cast %110 : vector<1x8x128xf32> to vector<8x128xf32>
    %112 = tpu.concatenate %107, %109, %111 in 1 : vector<8x128xf32>, vector<8x128xf32>, vector<8x128xf32> -> vector<8x384xf32>
    %c1_87 = arith.constant 1 : index
    %c0_88 = arith.constant 0 : index
    %c0_89 = arith.constant 0 : index
    %113 = vector.load %arg16[%c1_87, %c0_88, %c0_89] : memref<2x10x128xf32, #tpu.memory_space<vmem>>, vector<1x8x128xf32>
    %114 = vector.shape_cast %113 : vector<1x8x128xf32> to vector<8x128xf32>
    %c1_90 = arith.constant 1 : index
    %c1_91 = arith.constant 1 : index
    %c0_92 = arith.constant 0 : index
    %115 = vector.load %arg16[%c1_90, %c1_91, %c0_92] : memref<2x10x128xf32, #tpu.memory_space<vmem>>, vector<1x8x128xf32>
    %116 = vector.shape_cast %115 : vector<1x8x128xf32> to vector<8x128xf32>
    %c1_93 = arith.constant 1 : index
    %c2_94 = arith.constant 2 : index
    %c0_95 = arith.constant 0 : index
    %117 = vector.load %arg16[%c1_93, %c2_94, %c0_95] : memref<2x10x128xf32, #tpu.memory_space<vmem>>, vector<1x8x128xf32>
    %118 = vector.shape_cast %117 : vector<1x8x128xf32> to vector<8x128xf32>
    %119 = tpu.concatenate %114, %116, %118 in 1 : vector<8x128xf32>, vector<8x128xf32>, vector<8x128xf32> -> vector<8x384xf32>
    %120 = tpu.concatenate %112, %119 in 0 : vector<8x384xf32>, vector<8x384xf32> -> vector<16x384xf32>
    %121 = arith.truncf %120 : vector<16x384xf32> to vector<16x384xbf16>
    %c0_96 = arith.constant 0 : index
    %c0_97 = arith.constant 0 : index
    %122 = vector.load %arg7[%c0_96, %c0_97] : memref<384x128xbf16, #tpu.memory_space<vmem>>, vector<384x128xbf16>
    %cst_98 = arith.constant dense<0.000000e+00> : vector<16x128xf32>
    %123 = tpu.matmul %121, %122, %cst_98 {dimension_numbers = #tpu.dot_dimension_numbers<[1], [0], [0], [1], [0, 0, 1, 1], [], []>} : vector<16x384xbf16>, vector<384x128xbf16>, vector<16x128xf32> -> vector<16x128xf32>
    %cst_99 = arith.constant dense<0.000000e+00> : vector<128xf32>
    %124 = vector.multi_reduction <add>, %123, %cst_99 [0] : vector<16x128xf32> to vector<128xf32>
    %125 = vector.shape_cast %124 : vector<128xf32> to vector<1x128xf32>
    %cst_100 = arith.constant 6.250000e-02 : f32
    %126 = vector.broadcast %cst_100 : f32 to vector<1x128xf32>
    %127 = arith.mulf %125, %126 : vector<1x128xf32>
    %128 = arith.mulf %123, %123 : vector<16x128xf32>
    %cst_101 = arith.constant dense<0.000000e+00> : vector<128xf32>
    %129 = vector.multi_reduction <add>, %128, %cst_101 [0] : vector<16x128xf32> to vector<128xf32>
    %130 = vector.shape_cast %129 : vector<128xf32> to vector<1x128xf32>
    %cst_102 = arith.constant 6.250000e-02 : f32
    %131 = vector.broadcast %cst_102 : f32 to vector<1x128xf32>
    %132 = arith.mulf %130, %131 : vector<1x128xf32>
    %133 = arith.mulf %127, %127 : vector<1x128xf32>
    %134 = arith.subf %132, %133 : vector<1x128xf32>
    %c0_103 = arith.constant 0 : index
    %c0_104 = arith.constant 0 : index
    %135 = vector.load %arg8[%c0_103, %c0_104] : memref<1x128xf32, #tpu.memory_space<vmem>>, vector<1x128xf32>
    %cst_105 = arith.constant 9.99999974E-6 : f32
    %136 = vector.broadcast %cst_105 : f32 to vector<1x128xf32>
    %137 = arith.addf %134, %136 : vector<1x128xf32>
    %138 = math.rsqrt %137 : vector<1x128xf32>
    %139 = arith.mulf %135, %138 : vector<1x128xf32>
    %c0_106 = arith.constant 0 : index
    %c0_107 = arith.constant 0 : index
    %140 = vector.load %arg9[%c0_106, %c0_107] : memref<1x128xf32, #tpu.memory_space<vmem>>, vector<1x128xf32>
    %141 = arith.mulf %127, %139 : vector<1x128xf32>
    %142 = arith.subf %140, %141 : vector<1x128xf32>
    %143 = vector.broadcast %139 : vector<1x128xf32> to vector<16x128xf32>
    %144 = arith.mulf %123, %143 : vector<16x128xf32>
    %145 = vector.broadcast %142 : vector<1x128xf32> to vector<16x128xf32>
    %146 = arith.addf %144, %145 : vector<16x128xf32>
    %cst_108 = arith.constant 0.000000e+00 : f32
    %147 = vector.broadcast %cst_108 : f32 to vector<16x128xf32>
    %148 = arith.maximumf %146, %147 : vector<16x128xf32>
    %cst_109 = arith.constant 0.000000e+00 : f32
    %149 = vector.broadcast %cst_109 : f32 to vector<2x10x128xf32>
    %c0_110 = arith.constant 0 : index
    %c0_111 = arith.constant 0 : index
    %c0_112 = arith.constant 0 : index
    %150 = vector.load %arg17[%c0_110, %c0_111, %c0_112] : memref<2x10x128xf32, #tpu.memory_space<vmem>>, vector<2x10x128xf32>
    tpu.vector_store %arg17[%c0_110, %c0_111, %c0_112], %149 {strides = array<i32>} : memref<2x10x128xf32, #tpu.memory_space<vmem>>, vector<2x10x128xf32>,
    %151 = vector.extract_strided_slice %148 {offsets = [0, 0], sizes = [8, 128], strides = [1, 1]} : vector<16x128xf32> to vector<8x128xf32>
    %c0_113 = arith.constant 0 : index
    %c1_114 = arith.constant 1 : index
    %c0_115 = arith.constant 0 : index
    %152 = vector.load %arg17[%c0_113, %c1_114, %c0_115] : memref<2x10x128xf32, #tpu.memory_space<vmem>>, vector<1x8x128xf32>
    %153 = vector.shape_cast %152 : vector<1x8x128xf32> to vector<8x128xf32>
    %154 = vector.shape_cast %151 : vector<8x128xf32> to vector<1x8x128xf32>
    tpu.vector_store %arg17[%c0_113, %c1_114, %c0_115], %154 {strides = array<i32>} : memref<2x10x128xf32, #tpu.memory_space<vmem>>, vector<1x8x128xf32>,
    %155 = vector.extract_strided_slice %148 {offsets = [8, 0], sizes = [8, 128], strides = [1, 1]} : vector<16x128xf32> to vector<8x128xf32>
    %c1_116 = arith.constant 1 : index
    %c1_117 = arith.constant 1 : index
    %c0_118 = arith.constant 0 : index
    %156 = vector.load %arg17[%c1_116, %c1_117, %c0_118] : memref<2x10x128xf32, #tpu.memory_space<vmem>>, vector<1x8x128xf32>
    %157 = vector.shape_cast %156 : vector<1x8x128xf32> to vector<8x128xf32>
    %158 = vector.shape_cast %155 : vector<8x128xf32> to vector<1x8x128xf32>
    tpu.vector_store %arg17[%c1_116, %c1_117, %c0_118], %158 {strides = array<i32>} : memref<2x10x128xf32, #tpu.memory_space<vmem>>, vector<1x8x128xf32>,
    %c0_119 = arith.constant 0 : index
    %c0_120 = arith.constant 0 : index
    %c0_121 = arith.constant 0 : index
    %159 = vector.load %arg17[%c0_119, %c0_120, %c0_121] : memref<2x10x128xf32, #tpu.memory_space<vmem>>, vector<1x8x128xf32>
    %160 = vector.shape_cast %159 : vector<1x8x128xf32> to vector<8x128xf32>
    %c0_122 = arith.constant 0 : index
    %c1_123 = arith.constant 1 : index
    %c0_124 = arith.constant 0 : index
    %161 = vector.load %arg17[%c0_122, %c1_123, %c0_124] : memref<2x10x128xf32, #tpu.memory_space<vmem>>, vector<1x8x128xf32>
    %162 = vector.shape_cast %161 : vector<1x8x128xf32> to vector<8x128xf32>
    %c0_125 = arith.constant 0 : index
    %c2_126 = arith.constant 2 : index
    %c0_127 = arith.constant 0 : index
    %163 = vector.load %arg17[%c0_125, %c2_126, %c0_127] : memref<2x10x128xf32, #tpu.memory_space<vmem>>, vector<1x8x128xf32>
    %164 = vector.shape_cast %163 : vector<1x8x128xf32> to vector<8x128xf32>
    %165 = tpu.concatenate %160, %162, %164 in 1 : vector<8x128xf32>, vector<8x128xf32>, vector<8x128xf32> -> vector<8x384xf32>
    %c1_128 = arith.constant 1 : index
    %c0_129 = arith.constant 0 : index
    %c0_130 = arith.constant 0 : index
    %166 = vector.load %arg17[%c1_128, %c0_129, %c0_130] : memref<2x10x128xf32, #tpu.memory_space<vmem>>, vector<1x8x128xf32>
    %167 = vector.shape_cast %166 : vector<1x8x128xf32> to vector<8x128xf32>
    %c1_131 = arith.constant 1 : index
    %c1_132 = arith.constant 1 : index
    %c0_133 = arith.constant 0 : index
    %168 = vector.load %arg17[%c1_131, %c1_132, %c0_133] : memref<2x10x128xf32, #tpu.memory_space<vmem>>, vector<1x8x128xf32>
    %169 = vector.shape_cast %168 : vector<1x8x128xf32> to vector<8x128xf32>
    %c1_134 = arith.constant 1 : index
    %c2_135 = arith.constant 2 : index
    %c0_136 = arith.constant 0 : index
    %170 = vector.load %arg17[%c1_134, %c2_135, %c0_136] : memref<2x10x128xf32, #tpu.memory_space<vmem>>, vector<1x8x128xf32>
    %171 = vector.shape_cast %170 : vector<1x8x128xf32> to vector<8x128xf32>
    %172 = tpu.concatenate %167, %169, %171 in 1 : vector<8x128xf32>, vector<8x128xf32>, vector<8x128xf32> -> vector<8x384xf32>
    %173 = tpu.concatenate %165, %172 in 0 : vector<8x384xf32>, vector<8x384xf32> -> vector<16x384xf32>
    %174 = arith.truncf %173 : vector<16x384xf32> to vector<16x384xbf16>
    %c0_137 = arith.constant 0 : index
    %c0_138 = arith.constant 0 : index
    %175 = vector.load %arg10[%c0_137, %c0_138] : memref<384x128xbf16, #tpu.memory_space<vmem>>, vector<384x128xbf16>
    %cst_139 = arith.constant dense<0.000000e+00> : vector<16x128xf32>
    %176 = tpu.matmul %174, %175, %cst_139 {dimension_numbers = #tpu.dot_dimension_numbers<[1], [0], [0], [1], [0, 0, 1, 1], [], []>} : vector<16x384xbf16>, vector<384x128xbf16>, vector<16x128xf32> -> vector<16x128xf32>
    %cst_140 = arith.constant dense<0.000000e+00> : vector<128xf32>
    %177 = vector.multi_reduction <add>, %176, %cst_140 [0] : vector<16x128xf32> to vector<128xf32>
    %178 = vector.shape_cast %177 : vector<128xf32> to vector<1x128xf32>
    %cst_141 = arith.constant 6.250000e-02 : f32
    %179 = vector.broadcast %cst_141 : f32 to vector<1x128xf32>
    %180 = arith.mulf %178, %179 : vector<1x128xf32>
    %181 = arith.mulf %176, %176 : vector<16x128xf32>
    %cst_142 = arith.constant dense<0.000000e+00> : vector<128xf32>
    %182 = vector.multi_reduction <add>, %181, %cst_142 [0] : vector<16x128xf32> to vector<128xf32>
    %183 = vector.shape_cast %182 : vector<128xf32> to vector<1x128xf32>
    %cst_143 = arith.constant 6.250000e-02 : f32
    %184 = vector.broadcast %cst_143 : f32 to vector<1x128xf32>
    %185 = arith.mulf %183, %184 : vector<1x128xf32>
    %186 = arith.mulf %180, %180 : vector<1x128xf32>
    %187 = arith.subf %185, %186 : vector<1x128xf32>
    %c0_144 = arith.constant 0 : index
    %c0_145 = arith.constant 0 : index
    %188 = vector.load %arg11[%c0_144, %c0_145] : memref<1x128xf32, #tpu.memory_space<vmem>>, vector<1x128xf32>
    %cst_146 = arith.constant 9.99999974E-6 : f32
    %189 = vector.broadcast %cst_146 : f32 to vector<1x128xf32>
    %190 = arith.addf %187, %189 : vector<1x128xf32>
    %191 = math.rsqrt %190 : vector<1x128xf32>
    %192 = arith.mulf %188, %191 : vector<1x128xf32>
    %c0_147 = arith.constant 0 : index
    %c0_148 = arith.constant 0 : index
    %193 = vector.load %arg12[%c0_147, %c0_148] : memref<1x128xf32, #tpu.memory_space<vmem>>, vector<1x128xf32>
    %194 = arith.mulf %180, %192 : vector<1x128xf32>
    %195 = arith.subf %193, %194 : vector<1x128xf32>
    %196 = vector.broadcast %192 : vector<1x128xf32> to vector<16x128xf32>
    %197 = arith.mulf %176, %196 : vector<16x128xf32>
    %198 = vector.broadcast %195 : vector<1x128xf32> to vector<16x128xf32>
    %199 = arith.addf %197, %198 : vector<16x128xf32>
    %cst_149 = arith.constant 0.000000e+00 : f32
    %200 = vector.broadcast %cst_149 : f32 to vector<16x128xf32>
    %201 = arith.maximumf %199, %200 : vector<16x128xf32>
    %cst_150 = arith.constant 0.000000e+00 : f32
    %202 = vector.broadcast %cst_150 : f32 to vector<2x14x128xf32>
    %c0_151 = arith.constant 0 : index
    %c0_152 = arith.constant 0 : index
    %c0_153 = arith.constant 0 : index
    %203 = vector.load %arg18[%c0_151, %c0_152, %c0_153] : memref<2x14x128xf32, #tpu.memory_space<vmem>>, vector<2x14x128xf32>
    tpu.vector_store %arg18[%c0_151, %c0_152, %c0_153], %202 {strides = array<i32>} : memref<2x14x128xf32, #tpu.memory_space<vmem>>, vector<2x14x128xf32>,
    %204 = vector.extract_strided_slice %201 {offsets = [0, 0], sizes = [8, 128], strides = [1, 1]} : vector<16x128xf32> to vector<8x128xf32>
    %c0_154 = arith.constant 0 : index
    %c3 = arith.constant 3 : index
    %c0_155 = arith.constant 0 : index
    %205 = vector.load %arg18[%c0_154, %c3, %c0_155] : memref<2x14x128xf32, #tpu.memory_space<vmem>>, vector<1x8x128xf32>
    %206 = vector.shape_cast %205 : vector<1x8x128xf32> to vector<8x128xf32>
    %207 = vector.shape_cast %204 : vector<8x128xf32> to vector<1x8x128xf32>
    tpu.vector_store %arg18[%c0_154, %c3, %c0_155], %207 {strides = array<i32>} : memref<2x14x128xf32, #tpu.memory_space<vmem>>, vector<1x8x128xf32>,
    %208 = vector.extract_strided_slice %201 {offsets = [8, 0], sizes = [8, 128], strides = [1, 1]} : vector<16x128xf32> to vector<8x128xf32>
    %c1_156 = arith.constant 1 : index
    %c3_157 = arith.constant 3 : index
    %c0_158 = arith.constant 0 : index
    %209 = vector.load %arg18[%c1_156, %c3_157, %c0_158] : memref<2x14x128xf32, #tpu.memory_space<vmem>>, vector<1x8x128xf32>
    %210 = vector.shape_cast %209 : vector<1x8x128xf32> to vector<8x128xf32>
    %211 = vector.shape_cast %208 : vector<8x128xf32> to vector<1x8x128xf32>
    tpu.vector_store %arg18[%c1_156, %c3_157, %c0_158], %211 {strides = array<i32>} : memref<2x14x128xf32, #tpu.memory_space<vmem>>, vector<1x8x128xf32>,
    %c0_159 = arith.constant 0 : index
    %c0_160 = arith.constant 0 : index
    %c0_161 = arith.constant 0 : index
    %212 = vector.load %arg18[%c0_159, %c0_160, %c0_161] : memref<2x14x128xf32, #tpu.memory_space<vmem>>, vector<1x11x128xf32>
    %213 = vector.shape_cast %212 : vector<1x11x128xf32> to vector<11x128xf32>
    %c0_162 = arith.constant 0 : index
    %c1_163 = arith.constant 1 : index
    %c0_164 = arith.constant 0 : index
    %214 = vector.load %arg18[%c0_162, %c1_163, %c0_164] : memref<2x14x128xf32, #tpu.memory_space<vmem>>, vector<1x11x128xf32>
    %215 = vector.shape_cast %214 : vector<1x11x128xf32> to vector<11x128xf32>
    %c0_165 = arith.constant 0 : index
    %c2_166 = arith.constant 2 : index
    %c0_167 = arith.constant 0 : index
    %216 = vector.load %arg18[%c0_165, %c2_166, %c0_167] : memref<2x14x128xf32, #tpu.memory_space<vmem>>, vector<1x11x128xf32>
    %217 = vector.shape_cast %216 : vector<1x11x128xf32> to vector<11x128xf32>
    %c0_168 = arith.constant 0 : index
    %c3_169 = arith.constant 3 : index
    %c0_170 = arith.constant 0 : index
    %218 = vector.load %arg18[%c0_168, %c3_169, %c0_170] : memref<2x14x128xf32, #tpu.memory_space<vmem>>, vector<1x11x128xf32>
    %219 = vector.shape_cast %218 : vector<1x11x128xf32> to vector<11x128xf32>
    %220 = tpu.concatenate %213, %215, %217, %219 in 1 : vector<11x128xf32>, vector<11x128xf32>, vector<11x128xf32>, vector<11x128xf32> -> vector<11x512xf32>
    %c1_171 = arith.constant 1 : index
    %c0_172 = arith.constant 0 : index
    %c0_173 = arith.constant 0 : index
    %221 = vector.load %arg18[%c1_171, %c0_172, %c0_173] : memref<2x14x128xf32, #tpu.memory_space<vmem>>, vector<1x11x128xf32>
    %222 = vector.shape_cast %221 : vector<1x11x128xf32> to vector<11x128xf32>
    %c1_174 = arith.constant 1 : index
    %c1_175 = arith.constant 1 : index
    %c0_176 = arith.constant 0 : index
    %223 = vector.load %arg18[%c1_174, %c1_175, %c0_176] : memref<2x14x128xf32, #tpu.memory_space<vmem>>, vector<1x11x128xf32>
    %224 = vector.shape_cast %223 : vector<1x11x128xf32> to vector<11x128xf32>
    %c1_177 = arith.constant 1 : index
    %c2_178 = arith.constant 2 : index
    %c0_179 = arith.constant 0 : index
    %225 = vector.load %arg18[%c1_177, %c2_178, %c0_179] : memref<2x14x128xf32, #tpu.memory_space<vmem>>, vector<1x11x128xf32>
    %226 = vector.shape_cast %225 : vector<1x11x128xf32> to vector<11x128xf32>
    %c1_180 = arith.constant 1 : index
    %c3_181 = arith.constant 3 : index
    %c0_182 = arith.constant 0 : index
    %227 = vector.load %arg18[%c1_180, %c3_181, %c0_182] : memref<2x14x128xf32, #tpu.memory_space<vmem>>, vector<1x11x128xf32>
    %228 = vector.shape_cast %227 : vector<1x11x128xf32> to vector<11x128xf32>
    %229 = tpu.concatenate %222, %224, %226, %228 in 1 : vector<11x128xf32>, vector<11x128xf32>, vector<11x128xf32>, vector<11x128xf32> -> vector<11x512xf32>
    %230 = tpu.concatenate %220, %229 in 0 : vector<11x512xf32>, vector<11x512xf32> -> vector<22x512xf32>
    %231 = arith.truncf %230 : vector<22x512xf32> to vector<22x512xbf16>
    %c0_183 = arith.constant 0 : index
    %c0_184 = arith.constant 0 : index
    %232 = vector.load %arg13[%c0_183, %c0_184] : memref<512x256xbf16, #tpu.memory_space<vmem>>, vector<512x256xbf16>
    %cst_185 = arith.constant dense<0.000000e+00> : vector<22x256xf32>
    %233 = tpu.matmul %231, %232, %cst_185 {dimension_numbers = #tpu.dot_dimension_numbers<[1], [0], [0], [1], [0, 0, 1, 1], [], []>} : vector<22x512xbf16>, vector<512x256xbf16>, vector<22x256xf32> -> vector<22x256xf32>
    %234 = math.tanh %233 : vector<22x256xf32>
    %235 = vector.extract_strided_slice %234 {offsets = [0, 0], sizes = [11, 256], strides = [1, 1]} : vector<22x256xf32> to vector<11x256xf32>
    %c0_186 = arith.constant 0 : index
    %c0_187 = arith.constant 0 : index
    %c0_188 = arith.constant 0 : index
    %236 = vector.load %arg14[%c0_186, %c0_187, %c0_188] : memref<2x11x256xf32, #tpu.memory_space<vmem>>, vector<1x11x256xf32>
    %237 = vector.shape_cast %236 : vector<1x11x256xf32> to vector<11x256xf32>
    %238 = vector.shape_cast %235 : vector<11x256xf32> to vector<1x11x256xf32>
    tpu.vector_store %arg14[%c0_186, %c0_187, %c0_188], %238 {strides = array<i32>} : memref<2x11x256xf32, #tpu.memory_space<vmem>>, vector<1x11x256xf32>,
    %239 = vector.extract_strided_slice %234 {offsets = [11, 0], sizes = [11, 256], strides = [1, 1]} : vector<22x256xf32> to vector<11x256xf32>
    %c1_189 = arith.constant 1 : index
    %c0_190 = arith.constant 0 : index
    %c0_191 = arith.constant 0 : index
    %240 = vector.load %arg14[%c1_189, %c0_190, %c0_191] : memref<2x11x256xf32, #tpu.memory_space<vmem>>, vector<1x11x256xf32>
    %241 = vector.shape_cast %240 : vector<1x11x256xf32> to vector<11x256xf32>
    %242 = vector.shape_cast %239 : vector<11x256xf32> to vector<1x11x256xf32>
    tpu.vector_store %arg14[%c1_189, %c0_190, %c0_191], %242 {strides = array<i32>} : memref<2x11x256xf32, #tpu.memory_space<vmem>>, vector<1x11x256xf32>,
    return
  }
}

</mosaic_0001>

<llo_original>
// kernel: generator_forward.1
$region0: #{generator_forward.1}
  #allocation0 [shape = 'u32[]', space=smem, size = 0x4, offset = 0x4, fixed_abs, tag = 'smem constant byte address 0x4 - core index']
  #allocation1 [shape = 'u32[72,128]{1,0:T(1,128)}', space=vmem, size = 0x9000, scoped, tag = 'internal scratch']
  #allocation2 [shape = 'f32[2,10,256]{2,1,0:T(8,128)}', space=vmem, size = 0x8000, scoped, tag = 'scratch operand']
  #allocation3 [shape = 'f32[2,10,128]{2,1,0:T(8,128)}', space=vmem, size = 0x4000, scoped, tag = 'scratch operand']
  #allocation4 [shape = 'f32[2,10,128]{2,1,0:T(8,128)}', space=vmem, size = 0x4000, scoped, tag = 'scratch operand']
  #allocation5 [shape = 'f32[2,14,128]{2,1,0:T(8,128)}', space=vmem, size = 0x4000, scoped, tag = 'scratch operand']
  %s0 = inlined_call_operand.vmem [shape: f32[2,10,128], index: 0, kind: input, shape index: {}]
  %s1 = inlined_call_operand.hbm [shape: bf16[384,256], index: 1, kind: input, shape index: {}]
  %s2 = inlined_call_operand.vmem [shape: f32[1,256], index: 2, kind: input, shape index: {}]
  %s3 = inlined_call_operand.vmem [shape: f32[1,256], index: 3, kind: input, shape index: {}]
  %s4 = inlined_call_operand.hbm [shape: bf16[768,128], index: 4, kind: input, shape index: {}]
  %s5 = inlined_call_operand.vmem [shape: f32[1,128], index: 5, kind: input, shape index: {}]
  %s6 = inlined_call_operand.vmem [shape: f32[1,128], index: 6, kind: input, shape index: {}]
  %s7 = inlined_call_operand.hbm [shape: bf16[384,128], index: 7, kind: input, shape index: {}]
  %s8 = inlined_call_operand.vmem [shape: f32[1,128], index: 8, kind: input, shape index: {}]
  %s9 = inlined_call_operand.vmem [shape: f32[1,128], index: 9, kind: input, shape index: {}]
  %s10 = inlined_call_operand.hbm [shape: bf16[384,128], index: 10, kind: input, shape index: {}]
  %s11 = inlined_call_operand.vmem [shape: f32[1,128], index: 11, kind: input, shape index: {}]
  %s12 = inlined_call_operand.vmem [shape: f32[1,128], index: 12, kind: input, shape index: {}]
  %s13 = inlined_call_operand.hbm [shape: bf16[512,256], index: 13, kind: input, shape index: {}]
  %s14 = inlined_call_operand.vmem [shape: f32[2,11,256], index: 14, kind: output, shape index: {}]
  %s15 = sld [smem:[#allocation0]]
  $region86: #{generator_forward.1} parent=0
    _
  %s17 = ssub.s32 1, %s15
  %s18 = scalar_select 0, %s17, %s15
  $region1: #{generator_forward.1} parent=0
    #allocation6 [shape = 'u8[196608]{0}', space=vmem, size = 0x30000, scoped, tag = 'input window, operand 1, single buffered']
    #allocation7 [shape = 's32[1]{0}', space=sflag, size = 0x4, scoped, tag = 'scoped memory for generator_forward.1']
    #allocation8 [shape = 'u8[196608]{0}', space=vmem, size = 0x30000, scoped, tag = 'input window, operand 4, single buffered']
    #allocation9 [shape = 's32[1]{0}', space=sflag, size = 0x4, scoped, tag = 'scoped memory for generator_forward.1']
    #allocation10 [shape = 'u8[98304]{0}', space=vmem, size = 0x18000, scoped, tag = 'input window, operand 7, single buffered']
    #allocation11 [shape = 'u8[98304]{0}', space=vmem, size = 0x18000, scoped, tag = 'input window, operand 10, single buffered']
    #allocation12 [shape = 's32[1]{0}', space=sflag, size = 0x4, scoped, tag = 'scoped memory for generator_forward.1']
    #allocation13 [shape = 'u8[262144]{0}', space=vmem, size = 0x40000, scoped, tag = 'input window, operand 13, single buffered']
    %19 = vsyncpa [#allocation7], 0
    %20 = vsyncpa [#allocation9], 0
    %21 = vsyncpa [#allocation12], 0
    // Predicated region
    $region2: #{generator_forward.1} parent=1 // pred_check
      _
    $region3: #{generator_forward.1} parent=1 // pred_check_branch
      %23 = sbr.rel (0) target = $region5
    $region4: #{generator_forward.1} parent=1 // pred_region
      _
    $region5: #{generator_forward.1} parent=1 // pred_fallthru
      _
    // Predicated region
    $region6: #{generator_forward.1} parent=1 // pred_check
      _
    $region7: #{generator_forward.1} parent=1 // pred_check_branch
      %25 = sbr.rel (0) target = $region9
    $region8: #{generator_forward.1} parent=1 // pred_region
      %27 = vsyncadd [#allocation7], 0
      %s28 = sshll.u32 %s1, 4
      %s29 = int_to_ptr.hbm [resolvable:$true] %s28
      %s30 = sshll.u32 [#allocation6], 4
      %s31 = int_to_ptr.vmem [resolvable:$true] %s30
      %36 = dma.hbm_to_vmem [thread:$0]  %s29, 6144, %s31, [#allocation7], 128, 128, 8
    $region9: #{generator_forward.1} parent=1 // pred_fallthru
      _
    // Predicated region
    $region10: #{generator_forward.1} parent=1 // pred_check
      _
    $region11: #{generator_forward.1} parent=1 // pred_check_branch
      %38 = sbr.rel (0) target = $region13
    $region12: #{generator_forward.1} parent=1 // pred_region
      _
    $region13: #{generator_forward.1} parent=1 // pred_fallthru
      _
    // Predicated region
    $region14: #{generator_forward.1} parent=1 // pred_check
      _
    $region15: #{generator_forward.1} parent=1 // pred_check_branch
      %40 = sbr.rel (0) target = $region17
    $region16: #{generator_forward.1} parent=1 // pred_region
      _
    $region17: #{generator_forward.1} parent=1 // pred_fallthru
      _
    // Predicated region
    $region18: #{generator_forward.1} parent=1 // pred_check
      _
    $region19: #{generator_forward.1} parent=1 // pred_check_branch
      %42 = sbr.rel (0) target = $region21
    $region20: #{generator_forward.1} parent=1 // pred_region
      %44 = vsyncadd [#allocation9], 0
      %s45 = sshll.u32 %s4, 4
      %s46 = int_to_ptr.hbm [resolvable:$true] %s45
      %s47 = sshll.u32 [#allocation8], 4
      %s48 = int_to_ptr.vmem [resolvable:$true] %s47
      %53 = dma.hbm_to_vmem [thread:$0]  %s46, 6144, %s48, [#allocation9], 64, 64, 4
    $region21: #{generator_forward.1} parent=1 // pred_fallthru
      _
    // Predicated region
    $region22: #{generator_forward.1} parent=1 // pred_check
      _
    $region23: #{generator_forward.1} parent=1 // pred_check_branch
      %55 = sbr.rel (0) target = $region25
    $region24: #{generator_forward.1} parent=1 // pred_region
      _
    $region25: #{generator_forward.1} parent=1 // pred_fallthru
      _
    // Predicated region
    $region26: #{generator_forward.1} parent=1 // pred_check
      _
    $region27: #{generator_forward.1} parent=1 // pred_check_branch
      %57 = sbr.rel (0) target = $region29
    $region28: #{generator_forward.1} parent=1 // pred_region
      _
    $region29: #{generator_forward.1} parent=1 // pred_fallthru
      _
    // Predicated region
    $region30: #{generator_forward.1} parent=1 // pred_check
      _
    $region31: #{generator_forward.1} parent=1 // pred_check_branch
      %59 = sbr.rel (0) target = $region33
    $region32: #{generator_forward.1} parent=1 // pred_region
      %61 = vsyncadd [#allocation9], 0
      %s62 = sshll.u32 %s7, 4
      %s63 = int_to_ptr.hbm [resolvable:$true] %s62
      %s64 = sshll.u32 [#allocation10], 4
      %s65 = int_to_ptr.vmem [resolvable:$true] %s64
      %70 = dma.hbm_to_vmem [thread:$0]  %s63, 3072, %s65, [#allocation9], 64, 64, 4
    $region33: #{generator_forward.1} parent=1 // pred_fallthru
      _
    // Predicated region
    $region34: #{generator_forward.1} parent=1 // pred_check
      _
    $region35: #{generator_forward.1} parent=1 // pred_check_branch
      %72 = sbr.rel (0) target = $region37
    $region36: #{generator_forward.1} parent=1 // pred_region
      _
    $region37: #{generator_forward.1} parent=1 // pred_fallthru
      _
    // Predicated region
    $region38: #{generator_forward.1} parent=1 // pred_check
      _
    $region39: #{generator_forward.1} parent=1 // pred_check_branch
      %74 = sbr.rel (0) target = $region41
    $region40: #{generator_forward.1} parent=1 // pred_region
      _
    $region41: #{generator_forward.1} parent=1 // pred_fallthru
      _
    // Predicated region
    $region42: #{generator_forward.1} parent=1 // pred_check
      _
    $region43: #{generator_forward.1} parent=1 // pred_check_branch
      %76 = sbr.rel (0) target = $region45
    $region44: #{generator_forward.1} parent=1 // pred_region
      %78 = vsyncadd [#allocation12], 0
      %s79 = sshll.u32 %s10, 4
      %s80 = int_to_ptr.hbm [resolvable:$true] %s79
      %s81 = sshll.u32 [#allocation11], 4
      %s82 = int_to_ptr.vmem [resolvable:$true] %s81
      %87 = dma.hbm_to_vmem [thread:$0]  %s80, 3072, %s82, [#allocation12], 64, 64, 4
    $region45: #{generator_forward.1} parent=1 // pred_fallthru
      _
    // Predicated region
    $region46: #{generator_forward.1} parent=1 // pred_check
      _
    $region47: #{generator_forward.1} parent=1 // pred_check_branch
      %89 = sbr.rel (0) target = $region49
    $region48: #{generator_forward.1} parent=1 // pred_region
      _
    $region49: #{generator_forward.1} parent=1 // pred_fallthru
      _
    // Predicated region
    $region50: #{generator_forward.1} parent=1 // pred_check
      _
    $region51: #{generator_forward.1} parent=1 // pred_check_branch
      %91 = sbr.rel (0) target = $region53
    $region52: #{generator_forward.1} parent=1 // pred_region
      _
    $region53: #{generator_forward.1} parent=1 // pred_fallthru
      _
    // Predicated region
    $region54: #{generator_forward.1} parent=1 // pred_check
      _
    $region55: #{generator_forward.1} parent=1 // pred_check_branch
      %93 = sbr.rel (0) target = $region57
    $region56: #{generator_forward.1} parent=1 // pred_region
      %95 = vsyncadd [#allocation12], 0
      %s96 = sshll.u32 %s13, 4
      %s97 = int_to_ptr.hbm [resolvable:$true] %s96
      %s98 = sshll.u32 [#allocation13], 4
      %s99 = int_to_ptr.vmem [resolvable:$true] %s98
      %104 = dma.hbm_to_vmem [thread:$0]  %s97, 8192, %s99, [#allocation12], 128, 128, 8
    $region57: #{generator_forward.1} parent=1 // pred_fallthru
      _
    // Predicated region
    $region58: #{generator_forward.1} parent=1 // pred_check
      _
    $region59: #{generator_forward.1} parent=1 // pred_check_branch
      %106 = sbr.rel (0) target = $region61
    $region60: #{generator_forward.1} parent=1 // pred_region
      %108 = dma.done [#allocation7], 6144
    $region61: #{generator_forward.1} parent=1 // pred_fallthru
      _
    // Predicated region
    $region62: #{generator_forward.1} parent=1 // pred_check
      _
    $region63: #{generator_forward.1} parent=1 // pred_check_branch
      %110 = sbr.rel (0) target = $region65
    $region64: #{generator_forward.1} parent=1 // pred_region
      %112 = dma.done [#allocation9], 6144
    $region65: #{generator_forward.1} parent=1 // pred_fallthru
      _
    // Predicated region
    $region66: #{generator_forward.1} parent=1 // pred_check
      _
    $region67: #{generator_forward.1} parent=1 // pred_check_branch
      %114 = sbr.rel (0) target = $region69
    $region68: #{generator_forward.1} parent=1 // pred_region
      %116 = dma.done [#allocation9], 3072
    $region69: #{generator_forward.1} parent=1 // pred_fallthru
      _
    // Predicated region
    $region70: #{generator_forward.1} parent=1 // pred_check
      _
    $region71: #{generator_forward.1} parent=1 // pred_check_branch
      %118 = sbr.rel (0) target = $region73
    $region72: #{generator_forward.1} parent=1 // pred_region
      %120 = dma.done [#allocation12], 3072
    $region73: #{generator_forward.1} parent=1 // pred_fallthru
      _
    // Predicated region
    $region74: #{generator_forward.1} parent=1 // pred_check
      _
    $region75: #{generator_forward.1} parent=1 // pred_check_branch
      %122 = sbr.rel (0) target = $region77
    $region76: #{generator_forward.1} parent=1 // pred_region
      %124 = dma.done [#allocation12], 8192
    $region77: #{generator_forward.1} parent=1 // pred_fallthru
      _
    %v125 = vld [vmem:[%s0] sm:$0xff]
    %v126 = vld [vmem:[%s0 + $0x1] sm:$0xff]
    %v127 = vld [vmem:[%s0 + $0x2] sm:$0xff]
    %s128 = scalar_lea.vmem %s0, 16
    %v129 = vld [vmem:[%s128] sm:$0xff]
    %v130 = vld [vmem:[%s128 + $0x1] sm:$0xff]
    %v131 = vld [vmem:[%s128 + $0x2] sm:$0xff]
    %v132 = vpack.c.bf16 %v129, %v125
    %v133 = vpack.c.bf16 %v130, %v126
    %v134 = vpack.c.bf16 %v131, %v127
    %v135 = vld [vmem:[#allocation6] sm:$0xff]
    %v136 = vld [vmem:[#allocation6 + $0x8] sm:$0xff]
    %v137 = vld [vmem:[#allocation6 + $0x10] sm:$0xff]
    %v138 = vld [vmem:[#allocation6 + $0x18] sm:$0xff]
    %v139 = vld [vmem:[#allocation6 + $0x20] sm:$0xff]
    %v140 = vld [vmem:[#allocation6 + $0x28] sm:$0xff]
    %v141 = vld [vmem:[#allocation6 + $0x30] sm:$0xff]
    %v142 = vld [vmem:[#allocation6 + $0x38] sm:$0xff]
    %v143 = vld [vmem:[#allocation6 + $0x40] sm:$0xff]
    %v144 = vld [vmem:[#allocation6 + $0x48] sm:$0xff]
    %v145 = vld [vmem:[#allocation6 + $0x50] sm:$0xff]
    %v146 = vld [vmem:[#allocation6 + $0x58] sm:$0xff]
    %v147 = vld [vmem:[#allocation6 + $0x60] sm:$0xff]
    %v148 = vld [vmem:[#allocation6 + $0x68] sm:$0xff]
    %v149 = vld [vmem:[#allocation6 + $0x70] sm:$0xff]
    %v150 = vld [vmem:[#allocation6 + $0x78] sm:$0xff]
    %v151 = vld [vmem:[#allocation6 + $0x80] sm:$0xff]
    %v152 = vld [vmem:[#allocation6 + $0x88] sm:$0xff]
    %v153 = vld [vmem:[#allocation6 + $0x90] sm:$0xff]
    %v154 = vld [vmem:[#allocation6 + $0x98] sm:$0xff]
    %v155 = vld [vmem:[#allocation6 + $0xa0] sm:$0xff]
    %v156 = vld [vmem:[#allocation6 + $0xa8] sm:$0xff]
    %v157 = vld [vmem:[#allocation6 + $0xb0] sm:$0xff]
    %v158 = vld [vmem:[#allocation6 + $0xb8] sm:$0xff]
    %v159 = vld [vmem:[#allocation6 + $0xc0] sm:$0xff]
    %v160 = vld [vmem:[#allocation6 + $0xc8] sm:$0xff]
    %v161 = vld [vmem:[#allocation6 + $0xd0] sm:$0xff]
    %v162 = vld [vmem:[#allocation6 + $0xd8] sm:$0xff]
    %v163 = vld [vmem:[#allocation6 + $0xe0] sm:$0xff]
    %v164 = vld [vmem:[#allocation6 + $0xe8] sm:$0xff]
    %v165 = vld [vmem:[#allocation6 + $0xf0] sm:$0xff]
    %v166 = vld [vmem:[#allocation6 + $0xf8] sm:$0xff]
    %v167 = vld [vmem:[#allocation6 + $0x100] sm:$0xff]
    %v168 = vld [vmem:[#allocation6 + $0x108] sm:$0xff]
    %v169 = vld [vmem:[#allocation6 + $0x110] sm:$0xff]
    %v170 = vld [vmem:[#allocation6 + $0x118] sm:$0xff]
    %v171 = vld [vmem:[#allocation6 + $0x120] sm:$0xff]
    %v172 = vld [vmem:[#allocation6 + $0x128] sm:$0xff]
    %v173 = vld [vmem:[#allocation6 + $0x130] sm:$0xff]
    %v174 = vld [vmem:[#allocation6 + $0x138] sm:$0xff]
    %v175 = vld [vmem:[#allocation6 + $0x140] sm:$0xff]
    %v176 = vld [vmem:[#allocation6 + $0x148] sm:$0xff]
    %v177 = vld [vmem:[#allocation6 + $0x150] sm:$0xff]
    %v178 = vld [vmem:[#allocation6 + $0x158] sm:$0xff]
    %v179 = vld [vmem:[#allocation6 + $0x160] sm:$0xff]
    %v180 = vld [vmem:[#allocation6 + $0x168] sm:$0xff]
    %v181 = vld [vmem:[#allocation6 + $0x170] sm:$0xff]
    %v182 = vld [vmem:[#allocation6 + $0x178] sm:$0xff]
    %v231 = vunpack.c.l.b16 %v135
    %v232 = vunpack.c.h.b16 %v135
    %v233 = vunpack.c.l.b16 %v136
    %v234 = vunpack.c.h.b16 %v136
    %v235 = vunpack.c.l.b16 %v137
    %v236 = vunpack.c.h.b16 %v137
    %v237 = vunpack.c.l.b16 %v138
    %v238 = vunpack.c.h.b16 %v138
    %v239 = vunpack.c.l.b16 %v139
    %v240 = vunpack.c.h.b16 %v139
    %v241 = vunpack.c.l.b16 %v140
    %v242 = vunpack.c.h.b16 %v140
    %v243 = vunpack.c.l.b16 %v141
    %v244 = vunpack.c.h.b16 %v141
    %v245 = vunpack.c.l.b16 %v142
    %v246 = vunpack.c.h.b16 %v142
    %v247 = vunpack.c.l.b16 %v143
    %v248 = vunpack.c.h.b16 %v143
    %v249 = vunpack.c.l.b16 %v144
    %v250 = vunpack.c.h.b16 %v144
    %v251 = vunpack.c.l.b16 %v145
    %v252 = vunpack.c.h.b16 %v145
    %v253 = vunpack.c.l.b16 %v146
    %v254 = vunpack.c.h.b16 %v146
    %v255 = vunpack.c.l.b16 %v147
    %v256 = vunpack.c.h.b16 %v147
    %v257 = vunpack.c.l.b16 %v148
    %v258 = vunpack.c.h.b16 %v148
    %v259 = vunpack.c.l.b16 %v149
    %v260 = vunpack.c.h.b16 %v149
    %v261 = vunpack.c.l.b16 %v150
    %v262 = vunpack.c.h.b16 %v150
    %v263 = vunpack.c.l.b16 %v151
    %v264 = vunpack.c.h.b16 %v151
    %v265 = vunpack.c.l.b16 %v152
    %v266 = vunpack.c.h.b16 %v152
    %v267 = vunpack.c.l.b16 %v153
    %v268 = vunpack.c.h.b16 %v153
    %v269 = vunpack.c.l.b16 %v154
    %v270 = vunpack.c.h.b16 %v154
    %v271 = vunpack.c.l.b16 %v155
    %v272 = vunpack.c.h.b16 %v155
    %v273 = vunpack.c.l.b16 %v156
    %v274 = vunpack.c.h.b16 %v156
    %v275 = vunpack.c.l.b16 %v157
    %v276 = vunpack.c.h.b16 %v157
    %v277 = vunpack.c.l.b16 %v158
    %v278 = vunpack.c.h.b16 %v158
    %v279 = vunpack.c.l.b16 %v159
    %v280 = vunpack.c.h.b16 %v159
    %v281 = vunpack.c.l.b16 %v160
    %v282 = vunpack.c.h.b16 %v160
    %v283 = vunpack.c.l.b16 %v161
    %v284 = vunpack.c.h.b16 %v161
    %v285 = vunpack.c.l.b16 %v162
    %v286 = vunpack.c.h.b16 %v162
    %v287 = vunpack.c.l.b16 %v163
    %v288 = vunpack.c.h.b16 %v163
    %v289 = vunpack.c.l.b16 %v164
    %v290 = vunpack.c.h.b16 %v164
    %v291 = vunpack.c.l.b16 %v165
    %v292 = vunpack.c.h.b16 %v165
    %v293 = vunpack.c.l.b16 %v166
    %v294 = vunpack.c.h.b16 %v166
    %v295 = vunpack.c.l.b16 %v167
    %v296 = vunpack.c.h.b16 %v167
    %v297 = vunpack.c.l.b16 %v168
    %v298 = vunpack.c.h.b16 %v168
    %v299 = vunpack.c.l.b16 %v169
    %v300 = vunpack.c.h.b16 %v169
    %v301 = vunpack.c.l.b16 %v170
    %v302 = vunpack.c.h.b16 %v170
    %v303 = vunpack.c.l.b16 %v171
    %v304 = vunpack.c.h.b16 %v171
    %v305 = vunpack.c.l.b16 %v172
    %v306 = vunpack.c.h.b16 %v172
    %v307 = vunpack.c.l.b16 %v173
    %v308 = vunpack.c.h.b16 %v173
    %v309 = vunpack.c.l.b16 %v174
    %v310 = vunpack.c.h.b16 %v174
    %v311 = vunpack.c.l.b16 %v175
    %v312 = vunpack.c.h.b16 %v175
    %v313 = vunpack.c.l.b16 %v176
    %v314 = vunpack.c.h.b16 %v176
    %v315 = vunpack.c.l.b16 %v177
    %v316 = vunpack.c.h.b16 %v177
    %v317 = vunpack.c.l.b16 %v178
    %v318 = vunpack.c.h.b16 %v178
    %v319 = vunpack.c.l.b16 %v179
    %v320 = vunpack.c.h.b16 %v179
    %v321 = vunpack.c.l.b16 %v180
    %v322 = vunpack.c.h.b16 %v180
    %v323 = vunpack.c.l.b16 %v181
    %v324 = vunpack.c.h.b16 %v181
    %v325 = vunpack.c.l.b16 %v182
    %v326 = vunpack.c.h.b16 %v182
    %v327 = vpack.c.b16 %v233, %v231
    %v328 = vpack.c.b16 %v234, %v232
    %v329 = vpack.c.b16 %v237, %v235
    %v330 = vpack.c.b16 %v238, %v236
    %v331 = vpack.c.b16 %v241, %v239
    %v332 = vpack.c.b16 %v242, %v240
    %v333 = vpack.c.b16 %v245, %v243
    %v334 = vpack.c.b16 %v246, %v244
    %v335 = vpack.c.b16 %v249, %v247
    %v336 = vpack.c.b16 %v250, %v248
    %v337 = vpack.c.b16 %v253, %v251
    %v338 = vpack.c.b16 %v254, %v252
    %v339 = vpack.c.b16 %v257, %v255
    %v340 = vpack.c.b16 %v258, %v256
    %v341 = vpack.c.b16 %v261, %v259
    %v342 = vpack.c.b16 %v262, %v260
    %v343 = vpack.c.b16 %v265, %v263
    %v344 = vpack.c.b16 %v266, %v264
    %v345 = vpack.c.b16 %v269, %v267
    %v346 = vpack.c.b16 %v270, %v268
    %v347 = vpack.c.b16 %v273, %v271
    %v348 = vpack.c.b16 %v274, %v272
    %v349 = vpack.c.b16 %v277, %v275
    %v350 = vpack.c.b16 %v278, %v276
    %v351 = vpack.c.b16 %v281, %v279
    %v352 = vpack.c.b16 %v282, %v280
    %v353 = vpack.c.b16 %v285, %v283
    %v354 = vpack.c.b16 %v286, %v284
    %v355 = vpack.c.b16 %v289, %v287
    %v356 = vpack.c.b16 %v290, %v288
    %v357 = vpack.c.b16 %v293, %v291
    %v358 = vpack.c.b16 %v294, %v292
    %v359 = vpack.c.b16 %v297, %v295
    %v360 = vpack.c.b16 %v298, %v296
    %v361 = vpack.c.b16 %v301, %v299
    %v362 = vpack.c.b16 %v302, %v300
    %v363 = vpack.c.b16 %v305, %v303
    %v364 = vpack.c.b16 %v306, %v304
    %v365 = vpack.c.b16 %v309, %v307
    %v366 = vpack.c.b16 %v310, %v308
    %v367 = vpack.c.b16 %v313, %v311
    %v368 = vpack.c.b16 %v314, %v312
    %v369 = vpack.c.b16 %v317, %v315
    %v370 = vpack.c.b16 %v318, %v316
    %v371 = vpack.c.b16 %v321, %v319
    %v372 = vpack.c.b16 %v322, %v320
    %v373 = vpack.c.b16 %v325, %v323
    %v374 = vpack.c.b16 %v326, %v324
    %423 = vmatpush.bf16.msra.mxu0 %v341
    %424 = vmatpush.bf16.msra.mxu0 %v339
    %425 = vmatpush.bf16.msra.mxu0 %v337
    %426 = vmatpush.bf16.msra.mxu0 %v335
    %427 = vmatpush.bf16.msra.mxu0 %v333
    %428 = vmatpush.bf16.msra.mxu0 %v331
    %429 = vmatpush.bf16.msra.mxu0 %v329
    %430 = vmatpush.bf16.msra.mxu0 %v327
    %431 = vmatmul.bf16.gmra.mxu0 %v132
    %v432 = vpop.f32.mrf.mxu0
    %v433 = vadd.f32 0.0, %v432
    %v434 = vpop.f32.mrf.mxu0
    %v435 = vadd.f32 0.0, %v434
    %436 = vdwg.mxu0
    %437 = vmatpush.bf16.msra.mxu0 %v357
    %438 = vmatpush.bf16.msra.mxu0 %v355
    %439 = vmatpush.bf16.msra.mxu0 %v353
    %440 = vmatpush.bf16.msra.mxu0 %v351
    %441 = vmatpush.bf16.msra.mxu0 %v349
    %442 = vmatpush.bf16.msra.mxu0 %v347
    %443 = vmatpush.bf16.msra.mxu0 %v345
    %444 = vmatpush.bf16.msra.mxu0 %v343
    %445 = vmatmul.bf16.gmra.mxu0 %v133
    %v446 = vpop.f32.mrf.mxu0
    %v447 = vadd.f32 %v433, %v446
    %v448 = vpop.f32.mrf.mxu0
    %v449 = vadd.f32 %v435, %v448
    %450 = vdwg.mxu0
    %451 = vmatpush.bf16.msra.mxu0 %v373
    %452 = vmatpush.bf16.msra.mxu0 %v371
    %453 = vmatpush.bf16.msra.mxu0 %v369
    %454 = vmatpush.bf16.msra.mxu0 %v367
    %455 = vmatpush.bf16.msra.mxu0 %v365
    %456 = vmatpush.bf16.msra.mxu0 %v363
    %457 = vmatpush.bf16.msra.mxu0 %v361
    %458 = vmatpush.bf16.msra.mxu0 %v359
    %459 = vmatmul.bf16.gmra.mxu0 %v134
    %v460 = vpop.f32.mrf.mxu0
    %v461 = vadd.f32 %v447, %v460
    %v462 = vpop.f32.mrf.mxu0
    %v463 = vadd.f32 %v449, %v462
    %464 = vdwg.mxu0
    %465 = vmatpush.bf16.msra.mxu0 %v342
    %466 = vmatpush.bf16.msra.mxu0 %v340
    %467 = vmatpush.bf16.msra.mxu0 %v338
    %468 = vmatpush.bf16.msra.mxu0 %v336
    %469 = vmatpush.bf16.msra.mxu0 %v334
    %470 = vmatpush.bf16.msra.mxu0 %v332
    %471 = vmatpush.bf16.msra.mxu0 %v330
    %472 = vmatpush.bf16.msra.mxu0 %v328
    %473 = vmatmul.bf16.gmra.mxu0 %v132
    %v474 = vpop.f32.mrf.mxu0
    %v475 = vadd.f32 0.0, %v474
    %v476 = vpop.f32.mrf.mxu0
    %v477 = vadd.f32 0.0, %v476
    %478 = vdwg.mxu0
    %479 = vmatpush.bf16.msra.mxu0 %v358
    %480 = vmatpush.bf16.msra.mxu0 %v356
    %481 = vmatpush.bf16.msra.mxu0 %v354
    %482 = vmatpush.bf16.msra.mxu0 %v352
    %483 = vmatpush.bf16.msra.mxu0 %v350
    %484 = vmatpush.bf16.msra.mxu0 %v348
    %485 = vmatpush.bf16.msra.mxu0 %v346
    %486 = vmatpush.bf16.msra.mxu0 %v344
    %487 = vmatmul.bf16.gmra.mxu0 %v133
    %v488 = vpop.f32.mrf.mxu0
    %v489 = vadd.f32 %v475, %v488
    %v490 = vpop.f32.mrf.mxu0
    %v491 = vadd.f32 %v477, %v490
    %492 = vdwg.mxu0
    %493 = vmatpush.bf16.msra.mxu0 %v374
    %494 = vmatpush.bf16.msra.mxu0 %v372
    %495 = vmatpush.bf16.msra.mxu0 %v370
    %496 = vmatpush.bf16.msra.mxu0 %v368
    %497 = vmatpush.bf16.msra.mxu0 %v366
    %498 = vmatpush.bf16.msra.mxu0 %v364
    %499 = vmatpush.bf16.msra.mxu0 %v362
    %500 = vmatpush.bf16.msra.mxu0 %v360
    %501 = vmatmul.bf16.gmra.mxu0 %v134
    %v502 = vpop.f32.mrf.mxu0
    %v503 = vadd.f32 %v489, %v502
    %v504 = vpop.f32.mrf.mxu0
    %v505 = vadd.f32 %v491, %v504
    %506 = vdwg.mxu0
    %v507 = vadd.f32 %v461, %v463
    %v508 = vrot.slane %v507, 4
    %v509 = vadd.f32 %v507, %v508
    %v510 = vrot.slane %v509, 2
    %v511 = vadd.f32 %v509, %v510
    %v512 = vrot.slane %v511, 1
    %v513 = vadd.f32 %v511, %v512
    %v514 = vadd.f32 %v503, %v505
    %v515 = vrot.slane %v514, 4
    %v516 = vadd.f32 %v514, %v515
    %v517 = vrot.slane %v516, 2
    %v518 = vadd.f32 %v516, %v517
    %v519 = vrot.slane %v518, 1
    %v520 = vadd.f32 %v518, %v519
    %v521 = vmul.f32 %v513, 0.0625
    %v522 = vmul.f32 %v520, 0.0625
    %v523 = vmul.f32 %v461, %v461
    %v524 = vmul.f32 %v503, %v503
    %v525 = vmul.f32 %v463, %v463
    %v526 = vmul.f32 %v505, %v505
    %v527 = vadd.f32 %v523, %v525
    %v528 = vrot.slane %v527, 4
    %v529 = vadd.f32 %v527, %v528
    %v530 = vrot.slane %v529, 2
    %v531 = vadd.f32 %v529, %v530
    %v532 = vrot.slane %v531, 1
    %v533 = vadd.f32 %v531, %v532
    %v534 = vadd.f32 %v524, %v526
    %v535 = vrot.slane %v534, 4
    %v536 = vadd.f32 %v534, %v535
    %v537 = vrot.slane %v536, 2
    %v538 = vadd.f32 %v536, %v537
    %v539 = vrot.slane %v538, 1
    %v540 = vadd.f32 %v538, %v539
    %v541 = vmul.f32 %v533, 0.0625
    %v542 = vmul.f32 %v540, 0.0625
    %v543 = vmul.f32 %v521, %v521
    %v544 = vmul.f32 %v522, %v522
    %v545 = vsub.f32 %v541, %v543
    %v546 = vsub.f32 %v542, %v544
    %v547 = vld [vmem:[%s2] sm:$0x3]
    %v548 = vadd.f32 %v545, 1e-05
    %v549 = vadd.f32 %v546, 1e-05
    %v550 = vrsqrt.pop %v548
    %v551 = vmul.f32 %v550, %v548
    %v552 = vmul.f32 %v551, %v550
    %v553 = vmul.f32 0.5, %v552
    %v554 = vsub.f32 1.5, %v553
    %v555 = vmul.f32 %v550, %v554
    %vm556 = vweird.f32 %v548
    %vm557 = vweird.f32 %v550
    %vm558 = vmor %vm556, %vm557
    %v559 = vsel %vm558, %v550, %v555
    %v560 = vrsqrt.pop %v549
    %v561 = vmul.f32 %v560, %v549
    %v562 = vmul.f32 %v561, %v560
    %v563 = vmul.f32 0.5, %v562
    %v564 = vsub.f32 1.5, %v563
    %v565 = vmul.f32 %v560, %v564
    %vm566 = vweird.f32 %v549
    %vm567 = vweird.f32 %v560
    %vm568 = vmor %vm566, %vm567
    %v569 = vsel %vm568, %v560, %v565
    %v572 = vrot.slane %v569, 7
    %vm573 = vcmask 1040384
    %v574 = vsel %vm573, %v559, %v572
    %v576 = vmul.f32 %v547, %v574
    %v577 = vld [vmem:[%s3] sm:$0x3]
    %v579 = vperm.slane %v576, 0
    %v580 = vperm.slane %v576, 1
    %v583 = vmul.f32 %v521, %v579
    %v584 = vmul.f32 %v522, %v580
    %v587 = vrot.slane %v584, 7
    %v588 = vsel %vm573, %v583, %v587
    %v590 = vsub.f32 %v577, %v588
    %v591 = vmul.f32 %v461, %v579
    %v592 = vmul.f32 %v503, %v580
    %v593 = vmul.f32 %v463, %v579
    %v594 = vmul.f32 %v505, %v580
    %v596 = vperm.slane %v590, 0
    %v597 = vperm.slane %v590, 1
    %v600 = vadd.f32 %v591, %v596
    %v601 = vadd.f32 %v592, %v597
    %v602 = vadd.f32 %v593, %v596
    %v603 = vadd.f32 %v594, %v597
    %v604 = vmax.f32 %v600, 0.0
    %v605 = vmax.f32 %v601, 0.0
    %v606 = vmax.f32 %v602, 0.0
    %v607 = vmax.f32 %v603, 0.0
    %608 = vst [vmem:[#allocation2] sm:$0xff] 0.0
    %609 = vst [vmem:[#allocation2 + $0x8] sm:$0xff] 0.0
    %610 = vst [vmem:[#allocation2 + $0x10] sm:$0x3] 0.0
    %611 = vst [vmem:[#allocation2 + $0x18] sm:$0x3] 0.0
    %612 = vst [vmem:[#allocation2 + $0x20] sm:$0xff] 0.0
    %613 = vst [vmem:[#allocation2 + $0x28] sm:$0xff] 0.0
    %614 = vst [vmem:[#allocation2 + $0x30] sm:$0x3] 0.0
    %615 = vst [vmem:[#allocation2 + $0x38] sm:$0x3] 0.0
    %v618 = vrot.slane %v604, 7
    %v619 = vrot.slane %v605, 7
    %622 = vst [vmem:[#allocation2] sm:$0xfe] %v618
    %623 = vst [vmem:[#allocation2 + $0x8] sm:$0xfe] %v619
    %624 = vst [vmem:[#allocation2 + $0x10] sm:$0x1] %v618
    %625 = vst [vmem:[#allocation2 + $0x18] sm:$0x1] %v619
    %v628 = vrot.slane %v606, 7
    %v629 = vrot.slane %v607, 7
    %s632 = scalar_lea.vmem [#allocation2], 32
    %633 = vst [vmem:[%s632] sm:$0xfe] %v628
    %634 = vst [vmem:[%s632 + $0x8] sm:$0xfe] %v629
    %635 = vst [vmem:[%s632 + $0x10] sm:$0x1] %v628
    %636 = vst [vmem:[%s632 + $0x18] sm:$0x1] %v629
    %v637 = vld [vmem:[#allocation2] sm:$0xff]
    %v638 = vld [vmem:[#allocation2 + $0x8] sm:$0xff]
    %v639 = vld [vmem:[#allocation2] sm:$0xfe]
    %v640 = vld [vmem:[#allocation2 + $0x8] sm:$0xfe]
    %v641 = vld [vmem:[#allocation2 + $0x10] sm:$0x1]
    %v642 = vld [vmem:[#allocation2 + $0x18] sm:$0x1]
    %v643 = vld [vmem:[#allocation2] sm:$0xfc]
    %v644 = vld [vmem:[#allocation2 + $0x8] sm:$0xfc]
    %v645 = vld [vmem:[#allocation2 + $0x10] sm:$0x3]
    %v646 = vld [vmem:[#allocation2 + $0x18] sm:$0x3]
    %vm651 = vcmask 1046528
    %v652 = vrot.slane %v639, 1
    %v653 = vrot.slane %v641, 1
    %v654 = vsel %vm651, %v652, %v653
    %v655 = vrot.slane %v640, 1
    %v656 = vrot.slane %v642, 1
    %v657 = vsel %vm651, %v655, %v656
    %vm664 = vcmask 1045504
    %v665 = vrot.slane %v643, 2
    %v666 = vrot.slane %v645, 2
    %v667 = vsel %vm664, %v665, %v666
    %v668 = vrot.slane %v644, 2
    %v669 = vrot.slane %v646, 2
    %v670 = vsel %vm664, %v668, %v669
    %v673 = vld [vmem:[%s632] sm:$0xff]
    %v674 = vld [vmem:[%s632 + $0x8] sm:$0xff]
    %v675 = vld [vmem:[%s632] sm:$0xfe]
    %v676 = vld [vmem:[%s632 + $0x8] sm:$0xfe]
    %v677 = vld [vmem:[%s632 + $0x10] sm:$0x1]
    %v678 = vld [vmem:[%s632 + $0x18] sm:$0x1]
    %v679 = vld [vmem:[%s632] sm:$0xfc]
    %v680 = vld [vmem:[%s632 + $0x8] sm:$0xfc]
    %v681 = vld [vmem:[%s632 + $0x10] sm:$0x3]
    %v682 = vld [vmem:[%s632 + $0x18] sm:$0x3]
    %v687 = vrot.slane %v675, 1
    %v688 = vrot.slane %v677, 1
    %v689 = vsel %vm651, %v687, %v688
    %v690 = vrot.slane %v676, 1
    %v691 = vrot.slane %v678, 1
    %v692 = vsel %vm651, %v690, %v691
    %v699 = vrot.slane %v679, 2
    %v700 = vrot.slane %v681, 2
    %v701 = vsel %vm664, %v699, %v700
    %v702 = vrot.slane %v680, 2
    %v703 = vrot.slane %v682, 2
    %v704 = vsel %vm664, %v702, %v703
    %v707 = vpack.c.bf16 %v673, %v637
    %v708 = vpack.c.bf16 %v674, %v638
    %v709 = vpack.c.bf16 %v689, %v654
    %v710 = vpack.c.bf16 %v692, %v657
    %v711 = vpack.c.bf16 %v701, %v667
    %v712 = vpack.c.bf16 %v704, %v670
    %v713 = vld [vmem:[#allocation8] sm:$0xf]
    %v714 = vld [vmem:[#allocation8 + $0x4] sm:$0xf]
    %v715 = vld [vmem:[#allocation8 + $0x8] sm:$0xf]
    %v716 = vld [vmem:[#allocation8 + $0xc] sm:$0xf]
    %v717 = vld [vmem:[#allocation8 + $0x10] sm:$0xf]
    %v718 = vld [vmem:[#allocation8 + $0x14] sm:$0xf]
    %v719 = vld [vmem:[#allocation8 + $0x18] sm:$0xf]
    %v720 = vld [vmem:[#allocation8 + $0x1c] sm:$0xf]
    %v721 = vld [vmem:[#allocation8 + $0x20] sm:$0xf]
    %v722 = vld [vmem:[#allocation8 + $0x24] sm:$0xf]
    %v723 = vld [vmem:[#allocation8 + $0x28] sm:$0xf]
    %v724 = vld [vmem:[#allocation8 + $0x2c] sm:$0xf]
    %v725 = vld [vmem:[#allocation8 + $0x30] sm:$0xf]
    %v726 = vld [vmem:[#allocation8 + $0x34] sm:$0xf]
    %v727 = vld [vmem:[#allocation8 + $0x38] sm:$0xf]
    %v728 = vld [vmem:[#allocation8 + $0x3c] sm:$0xf]
    %v729 = vld [vmem:[#allocation8 + $0x40] sm:$0xf]
    %v730 = vld [vmem:[#allocation8 + $0x44] sm:$0xf]
    %v731 = vld [vmem:[#allocation8 + $0x48] sm:$0xf]
    %v732 = vld [vmem:[#allocation8 + $0x4c] sm:$0xf]
    %v733 = vld [vmem:[#allocation8 + $0x50] sm:$0xf]
    %v734 = vld [vmem:[#allocation8 + $0x54] sm:$0xf]
    %v735 = vld [vmem:[#allocation8 + $0x58] sm:$0xf]
    %v736 = vld [vmem:[#allocation8 + $0x5c] sm:$0xf]
    %v737 = vld [vmem:[#allocation8 + $0x60] sm:$0xf]
    %v738 = vld [vmem:[#allocation8 + $0x64] sm:$0xf]
    %v739 = vld [vmem:[#allocation8 + $0x68] sm:$0xf]
    %v740 = vld [vmem:[#allocation8 + $0x6c] sm:$0xf]
    %v741 = vld [vmem:[#allocation8 + $0x70] sm:$0xf]
    %v742 = vld [vmem:[#allocation8 + $0x74] sm:$0xf]
    %v743 = vld [vmem:[#allocation8 + $0x78] sm:$0xf]
    %v744 = vld [vmem:[#allocation8 + $0x7c] sm:$0xf]
    %v745 = vld [vmem:[#allocation8 + $0x80] sm:$0xf]
    %v746 = vld [vmem:[#allocation8 + $0x84] sm:$0xf]
    %v747 = vld [vmem:[#allocation8 + $0x88] sm:$0xf]
    %v748 = vld [vmem:[#allocation8 + $0x8c] sm:$0xf]
    %v749 = vld [vmem:[#allocation8 + $0x90] sm:$0xf]
    %v750 = vld [vmem:[#allocation8 + $0x94] sm:$0xf]
    %v751 = vld [vmem:[#allocation8 + $0x98] sm:$0xf]
    %v752 = vld [vmem:[#allocation8 + $0x9c] sm:$0xf]
    %v753 = vld [vmem:[#allocation8 + $0xa0] sm:$0xf]
    %v754 = vld [vmem:[#allocation8 + $0xa4] sm:$0xf]
    %v755 = vld [vmem:[#allocation8 + $0xa8] sm:$0xf]
    %v756 = vld [vmem:[#allocation8 + $0xac] sm:$0xf]
    %v757 = vld [vmem:[#allocation8 + $0xb0] sm:$0xf]
    %v758 = vld [vmem:[#allocation8 + $0xb4] sm:$0xf]
    %v759 = vld [vmem:[#allocation8 + $0xb8] sm:$0xf]
    %v760 = vld [vmem:[#allocation8 + $0xbc] sm:$0xf]
    %v761 = vld [vmem:[#allocation8 + $0xc0] sm:$0xf]
    %v762 = vld [vmem:[#allocation8 + $0xc4] sm:$0xf]
    %v763 = vld [vmem:[#allocation8 + $0xc8] sm:$0xf]
    %v764 = vld [vmem:[#allocation8 + $0xcc] sm:$0xf]
    %v765 = vld [vmem:[#allocation8 + $0xd0] sm:$0xf]
    %v766 = vld [vmem:[#allocation8 + $0xd4] sm:$0xf]
    %v767 = vld [vmem:[#allocation8 + $0xd8] sm:$0xf]
    %v768 = vld [vmem:[#allocation8 + $0xdc] sm:$0xf]
    %v769 = vld [vmem:[#allocation8 + $0xe0] sm:$0xf]
    %v770 = vld [vmem:[#allocation8 + $0xe4] sm:$0xf]
    %v771 = vld [vmem:[#allocation8 + $0xe8] sm:$0xf]
    %v772 = vld [vmem:[#allocation8 + $0xec] sm:$0xf]
    %v773 = vld [vmem:[#allocation8 + $0xf0] sm:$0xf]
    %v774 = vld [vmem:[#allocation8 + $0xf4] sm:$0xf]
    %v775 = vld [vmem:[#allocation8 + $0xf8] sm:$0xf]
    %v776 = vld [vmem:[#allocation8 + $0xfc] sm:$0xf]
    %v777 = vld [vmem:[#allocation8 + $0x100] sm:$0xf]
    %v778 = vld [vmem:[#allocation8 + $0x104] sm:$0xf]
    %v779 = vld [vmem:[#allocation8 + $0x108] sm:$0xf]
    %v780 = vld [vmem:[#allocation8 + $0x10c] sm:$0xf]
    %v781 = vld [vmem:[#allocation8 + $0x110] sm:$0xf]
    %v782 = vld [vmem:[#allocation8 + $0x114] sm:$0xf]
    %v783 = vld [vmem:[#allocation8 + $0x118] sm:$0xf]
    %v784 = vld [vmem:[#allocation8 + $0x11c] sm:$0xf]
    %v785 = vld [vmem:[#allocation8 + $0x120] sm:$0xf]
    %v786 = vld [vmem:[#allocation8 + $0x124] sm:$0xf]
    %v787 = vld [vmem:[#allocation8 + $0x128] sm:$0xf]
    %v788 = vld [vmem:[#allocation8 + $0x12c] sm:$0xf]
    %v789 = vld [vmem:[#allocation8 + $0x130] sm:$0xf]
    %v790 = vld [vmem:[#allocation8 + $0x134] sm:$0xf]
    %v791 = vld [vmem:[#allocation8 + $0x138] sm:$0xf]
    %v792 = vld [vmem:[#allocation8 + $0x13c] sm:$0xf]
    %v793 = vld [vmem:[#allocation8 + $0x140] sm:$0xf]
    %v794 = vld [vmem:[#allocation8 + $0x144] sm:$0xf]
    %v795 = vld [vmem:[#allocation8 + $0x148] sm:$0xf]
    %v796 = vld [vmem:[#allocation8 + $0x14c] sm:$0xf]
    %v797 = vld [vmem:[#allocation8 + $0x150] sm:$0xf]
    %v798 = vld [vmem:[#allocation8 + $0x154] sm:$0xf]
    %v799 = vld [vmem:[#allocation8 + $0x158] sm:$0xf]
    %v800 = vld [vmem:[#allocation8 + $0x15c] sm:$0xf]
    %v801 = vld [vmem:[#allocation8 + $0x160] sm:$0xf]
    %v802 = vld [vmem:[#allocation8 + $0x164] sm:$0xf]
    %v803 = vld [vmem:[#allocation8 + $0x168] sm:$0xf]
    %v804 = vld [vmem:[#allocation8 + $0x16c] sm:$0xf]
    %v805 = vld [vmem:[#allocation8 + $0x170] sm:$0xf]
    %v806 = vld [vmem:[#allocation8 + $0x174] sm:$0xf]
    %v807 = vld [vmem:[#allocation8 + $0x178] sm:$0xf]
    %v808 = vld [vmem:[#allocation8 + $0x17c] sm:$0xf]
    %v905 = vunpack.c.l.b16 %v713
    %v906 = vunpack.c.l.b16 %v714
    %v907 = vunpack.c.l.b16 %v715
    %v908 = vunpack.c.l.b16 %v716
    %v909 = vunpack.c.l.b16 %v717
    %v910 = vunpack.c.l.b16 %v718
    %v911 = vunpack.c.l.b16 %v719
    %v912 = vunpack.c.l.b16 %v720
    %v913 = vunpack.c.l.b16 %v721
    %v914 = vunpack.c.l.b16 %v722
    %v915 = vunpack.c.l.b16 %v723
    %v916 = vunpack.c.l.b16 %v724
    %v917 = vunpack.c.l.b16 %v725
    %v918 = vunpack.c.l.b16 %v726
    %v919 = vunpack.c.l.b16 %v727
    %v920 = vunpack.c.l.b16 %v728
    %v921 = vunpack.c.l.b16 %v729
    %v922 = vunpack.c.l.b16 %v730
    %v923 = vunpack.c.l.b16 %v731
    %v924 = vunpack.c.l.b16 %v732
    %v925 = vunpack.c.l.b16 %v733
    %v926 = vunpack.c.l.b16 %v734
    %v927 = vunpack.c.l.b16 %v735
    %v928 = vunpack.c.l.b16 %v736
    %v929 = vunpack.c.l.b16 %v737
    %v930 = vunpack.c.l.b16 %v738
    %v931 = vunpack.c.l.b16 %v739
    %v932 = vunpack.c.l.b16 %v740
    %v933 = vunpack.c.l.b16 %v741
    %v934 = vunpack.c.l.b16 %v742
    %v935 = vunpack.c.l.b16 %v743
    %v936 = vunpack.c.l.b16 %v744
    %v937 = vunpack.c.l.b16 %v745
    %v938 = vunpack.c.l.b16 %v746
    %v939 = vunpack.c.l.b16 %v747
    %v940 = vunpack.c.l.b16 %v748
    %v941 = vunpack.c.l.b16 %v749
    %v942 = vunpack.c.l.b16 %v750
    %v943 = vunpack.c.l.b16 %v751
    %v944 = vunpack.c.l.b16 %v752
    %v945 = vunpack.c.l.b16 %v753
    %v946 = vunpack.c.l.b16 %v754
    %v947 = vunpack.c.l.b16 %v755
    %v948 = vunpack.c.l.b16 %v756
    %v949 = vunpack.c.l.b16 %v757
    %v950 = vunpack.c.l.b16 %v758
    %v951 = vunpack.c.l.b16 %v759
    %v952 = vunpack.c.l.b16 %v760
    %v953 = vunpack.c.l.b16 %v761
    %v954 = vunpack.c.l.b16 %v762
    %v955 = vunpack.c.l.b16 %v763
    %v956 = vunpack.c.l.b16 %v764
    %v957 = vunpack.c.l.b16 %v765
    %v958 = vunpack.c.l.b16 %v766
    %v959 = vunpack.c.l.b16 %v767
    %v960 = vunpack.c.l.b16 %v768
    %v961 = vunpack.c.l.b16 %v769
    %v962 = vunpack.c.l.b16 %v770
    %v963 = vunpack.c.l.b16 %v771
    %v964 = vunpack.c.l.b16 %v772
    %v965 = vunpack.c.l.b16 %v773
    %v966 = vunpack.c.l.b16 %v774
    %v967 = vunpack.c.l.b16 %v775
    %v968 = vunpack.c.l.b16 %v776
    %v969 = vunpack.c.l.b16 %v777
    %v970 = vunpack.c.l.b16 %v778
    %v971 = vunpack.c.l.b16 %v779
    %v972 = vunpack.c.l.b16 %v780
    %v973 = vunpack.c.l.b16 %v781
    %v974 = vunpack.c.l.b16 %v782
    %v975 = vunpack.c.l.b16 %v783
    %v976 = vunpack.c.l.b16 %v784
    %v977 = vunpack.c.l.b16 %v785
    %v978 = vunpack.c.l.b16 %v786
    %v979 = vunpack.c.l.b16 %v787
    %v980 = vunpack.c.l.b16 %v788
    %v981 = vunpack.c.l.b16 %v789
    %v982 = vunpack.c.l.b16 %v790
    %v983 = vunpack.c.l.b16 %v791
    %v984 = vunpack.c.l.b16 %v792
    %v985 = vunpack.c.l.b16 %v793
    %v986 = vunpack.c.l.b16 %v794
    %v987 = vunpack.c.l.b16 %v795
    %v988 = vunpack.c.l.b16 %v796
    %v989 = vunpack.c.l.b16 %v797
    %v990 = vunpack.c.l.b16 %v798
    %v991 = vunpack.c.l.b16 %v799
    %v992 = vunpack.c.l.b16 %v800
    %v993 = vunpack.c.l.b16 %v801
    %v994 = vunpack.c.l.b16 %v802
    %v995 = vunpack.c.l.b16 %v803
    %v996 = vunpack.c.l.b16 %v804
    %v997 = vunpack.c.l.b16 %v805
    %v998 = vunpack.c.l.b16 %v806
    %v999 = vunpack.c.l.b16 %v807
    %v1000 = vunpack.c.l.b16 %v808
    %v1001 = vpack.c.b16 %v906, %v905
    %v1002 = vpack.c.b16 %v908, %v907
    %v1003 = vpack.c.b16 %v910, %v909
    %v1004 = vpack.c.b16 %v912, %v911
    %v1005 = vpack.c.b16 %v914, %v913
    %v1006 = vpack.c.b16 %v916, %v915
    %v1007 = vpack.c.b16 %v918, %v917
    %v1008 = vpack.c.b16 %v920, %v919
    %v1009 = vpack.c.b16 %v922, %v921
    %v1010 = vpack.c.b16 %v924, %v923
    %v1011 = vpack.c.b16 %v926, %v925
    %v1012 = vpack.c.b16 %v928, %v927
    %v1013 = vpack.c.b16 %v930, %v929
    %v1014 = vpack.c.b16 %v932, %v931
    %v1015 = vpack.c.b16 %v934, %v933
    %v1016 = vpack.c.b16 %v936, %v935
    %v1017 = vpack.c.b16 %v938, %v937
    %v1018 = vpack.c.b16 %v940, %v939
    %v1019 = vpack.c.b16 %v942, %v941
    %v1020 = vpack.c.b16 %v944, %v943
    %v1021 = vpack.c.b16 %v946, %v945
    %v1022 = vpack.c.b16 %v948, %v947
    %v1023 = vpack.c.b16 %v950, %v949
    %v1024 = vpack.c.b16 %v952, %v951
    %v1025 = vpack.c.b16 %v954, %v953
    %v1026 = vpack.c.b16 %v956, %v955
    %v1027 = vpack.c.b16 %v958, %v957
    %v1028 = vpack.c.b16 %v960, %v959
    %v1029 = vpack.c.b16 %v962, %v961
    %v1030 = vpack.c.b16 %v964, %v963
    %v1031 = vpack.c.b16 %v966, %v965
    %v1032 = vpack.c.b16 %v968, %v967
    %v1033 = vpack.c.b16 %v970, %v969
    %v1034 = vpack.c.b16 %v972, %v971
    %v1035 = vpack.c.b16 %v974, %v973
    %v1036 = vpack.c.b16 %v976, %v975
    %v1037 = vpack.c.b16 %v978, %v977
    %v1038 = vpack.c.b16 %v980, %v979
    %v1039 = vpack.c.b16 %v982, %v981
    %v1040 = vpack.c.b16 %v984, %v983
    %v1041 = vpack.c.b16 %v986, %v985
    %v1042 = vpack.c.b16 %v988, %v987
    %v1043 = vpack.c.b16 %v990, %v989
    %v1044 = vpack.c.b16 %v992, %v991
    %v1045 = vpack.c.b16 %v994, %v993
    %v1046 = vpack.c.b16 %v996, %v995
    %v1047 = vpack.c.b16 %v998, %v997
    %v1048 = vpack.c.b16 %v1000, %v999
    %1097 = vmatpush.bf16.msra.mxu0 %v1008
    %1098 = vmatpush.bf16.msra.mxu0 %v1007
    %1099 = vmatpush.bf16.msra.mxu0 %v1006
    %1100 = vmatpush.bf16.msra.mxu0 %v1005
    %1101 = vmatpush.bf16.msra.mxu0 %v1004
    %1102 = vmatpush.bf16.msra.mxu0 %v1003
    %1103 = vmatpush.bf16.msra.mxu0 %v1002
    %1104 = vmatpush.bf16.msra.mxu0 %v1001
    %1105 = vmatmul.bf16.gmra.mxu0 %v707
    %v1106 = vpop.f32.mrf.mxu0
    %v1107 = vadd.f32 0.0, %v1106
    %v1108 = vpop.f32.mrf.mxu0
    %v1109 = vadd.f32 0.0, %v1108
    %1110 = vdwg.mxu0
    %1111 = vmatpush.bf16.msra.mxu0 %v1016
    %1112 = vmatpush.bf16.msra.mxu0 %v1015
    %1113 = vmatpush.bf16.msra.mxu0 %v1014
    %1114 = vmatpush.bf16.msra.mxu0 %v1013
    %1115 = vmatpush.bf16.msra.mxu0 %v1012
    %1116 = vmatpush.bf16.msra.mxu0 %v1011
    %1117 = vmatpush.bf16.msra.mxu0 %v1010
    %1118 = vmatpush.bf16.msra.mxu0 %v1009
    %1119 = vmatmul.bf16.gmra.mxu0 %v708
    %v1120 = vpop.f32.mrf.mxu0
    %v1121 = vadd.f32 %v1107, %v1120
    %v1122 = vpop.f32.mrf.mxu0
    %v1123 = vadd.f32 %v1109, %v1122
    %1124 = vdwg.mxu0
    %1125 = vmatpush.bf16.msra.mxu0 %v1024
    %1126 = vmatpush.bf16.msra.mxu0 %v1023
    %1127 = vmatpush.bf16.msra.mxu0 %v1022
    %1128 = vmatpush.bf16.msra.mxu0 %v1021
    %1129 = vmatpush.bf16.msra.mxu0 %v1020
    %1130 = vmatpush.bf16.msra.mxu0 %v1019
    %1131 = vmatpush.bf16.msra.mxu0 %v1018
    %1132 = vmatpush.bf16.msra.mxu0 %v1017
    %1133 = vmatmul.bf16.gmra.mxu0 %v709
    %v1134 = vpop.f32.mrf.mxu0
    %v1135 = vadd.f32 %v1121, %v1134
    %v1136 = vpop.f32.mrf.mxu0
    %v1137 = vadd.f32 %v1123, %v1136
    %1138 = vdwg.mxu0
    %1139 = vmatpush.bf16.msra.mxu0 %v1032
    %1140 = vmatpush.bf16.msra.mxu0 %v1031
    %1141 = vmatpush.bf16.msra.mxu0 %v1030
    %1142 = vmatpush.bf16.msra.mxu0 %v1029
    %1143 = vmatpush.bf16.msra.mxu0 %v1028
    %1144 = vmatpush.bf16.msra.mxu0 %v1027
    %1145 = vmatpush.bf16.msra.mxu0 %v1026
    %1146 = vmatpush.bf16.msra.mxu0 %v1025
    %1147 = vmatmul.bf16.gmra.mxu0 %v710
    %v1148 = vpop.f32.mrf.mxu0
    %v1149 = vadd.f32 %v1135, %v1148
    %v1150 = vpop.f32.mrf.mxu0
    %v1151 = vadd.f32 %v1137, %v1150
    %1152 = vdwg.mxu0
    %1153 = vmatpush.bf16.msra.mxu0 %v1040
    %1154 = vmatpush.bf16.msra.mxu0 %v1039
    %1155 = vmatpush.bf16.msra.mxu0 %v1038
    %1156 = vmatpush.bf16.msra.mxu0 %v1037
    %1157 = vmatpush.bf16.msra.mxu0 %v1036
    %1158 = vmatpush.bf16.msra.mxu0 %v1035
    %1159 = vmatpush.bf16.msra.mxu0 %v1034
    %1160 = vmatpush.bf16.msra.mxu0 %v1033
    %1161 = vmatmul.bf16.gmra.mxu0 %v711
    %v1162 = vpop.f32.mrf.mxu0
    %v1163 = vadd.f32 %v1149, %v1162
    %v1164 = vpop.f32.mrf.mxu0
    %v1165 = vadd.f32 %v1151, %v1164
    %1166 = vdwg.mxu0
    %1167 = vmatpush.bf16.msra.mxu0 %v1048
    %1168 = vmatpush.bf16.msra.mxu0 %v1047
    %1169 = vmatpush.bf16.msra.mxu0 %v1046
    %1170 = vmatpush.bf16.msra.mxu0 %v1045
    %1171 = vmatpush.bf16.msra.mxu0 %v1044
    %1172 = vmatpush.bf16.msra.mxu0 %v1043
    %1173 = vmatpush.bf16.msra.mxu0 %v1042
    %1174 = vmatpush.bf16.msra.mxu0 %v1041
    %1175 = vmatmul.bf16.gmra.mxu0 %v712
    %v1176 = vpop.f32.mrf.mxu0
    %v1177 = vadd.f32 %v1163, %v1176
    %v1178 = vpop.f32.mrf.mxu0
    %v1179 = vadd.f32 %v1165, %v1178
    %1180 = vdwg.mxu0
    %v1181 = vadd.f32 %v1177, %v1179
    %v1182 = vrot.slane %v1181, 4
    %v1183 = vadd.f32 %v1181, %v1182
    %v1184 = vrot.slane %v1183, 2
    %v1185 = vadd.f32 %v1183, %v1184
    %v1186 = vrot.slane %v1185, 1
    %v1187 = vadd.f32 %v1185, %v1186
    %v1188 = vmul.f32 %v1187, 0.0625
    %v1189 = vmul.f32 %v1177, %v1177
    %v1190 = vmul.f32 %v1179, %v1179
    %v1191 = vadd.f32 %v1189, %v1190
    %v1192 = vrot.slane %v1191, 4
    %v1193 = vadd.f32 %v1191, %v1192
    %v1194 = vrot.slane %v1193, 2
    %v1195 = vadd.f32 %v1193, %v1194
    %v1196 = vrot.slane %v1195, 1
    %v1197 = vadd.f32 %v1195, %v1196
    %v1198 = vmul.f32 %v1197, 0.0625
    %v1199 = vmul.f32 %v1188, %v1188
    %v1200 = vsub.f32 %v1198, %v1199
    %v1201 = vld [vmem:[%s5] sm:$0x1]
    %v1202 = vadd.f32 %v1200, 1e-05
    %v1203 = vrsqrt.pop %v1202
    %v1204 = vmul.f32 %v1203, %v1202
    %v1205 = vmul.f32 %v1204, %v1203
    %v1206 = vmul.f32 0.5, %v1205
    %v1207 = vsub.f32 1.5, %v1206
    %v1208 = vmul.f32 %v1203, %v1207
    %vm1209 = vweird.f32 %v1202
    %vm1210 = vweird.f32 %v1203
    %vm1211 = vmor %vm1209, %vm1210
    %v1212 = vsel %vm1211, %v1203, %v1208
    %v1213 = vmul.f32 %v1201, %v1212
    %v1214 = vld [vmem:[%s6] sm:$0x1]
    %v1215 = vmul.f32 %v1188, %v1213
    %v1216 = vsub.f32 %v1214, %v1215
    %v1218 = vperm.slane %v1213, 0
    %v1220 = vmul.f32 %v1177, %v1218
    %v1221 = vmul.f32 %v1179, %v1218
    %v1223 = vperm.slane %v1216, 0
    %v1225 = vadd.f32 %v1220, %v1223
    %v1226 = vadd.f32 %v1221, %v1223
    %v1227 = vmax.f32 %v1225, 0.0
    %v1228 = vmax.f32 %v1226, 0.0
    %1229 = vst [vmem:[#allocation3] sm:$0xff] 0.0
    %1230 = vst [vmem:[#allocation3 + $0x8] sm:$0x3] 0.0
    %1231 = vst [vmem:[#allocation3 + $0x10] sm:$0xff] 0.0
    %1232 = vst [vmem:[#allocation3 + $0x18] sm:$0x3] 0.0
    %1233 = vst [vmem:[#allocation3 + $0x1] sm:$0xff] %v1227
    %s1234 = scalar_lea.vmem [#allocation3], 16
    %1235 = vst [vmem:[%s1234 + $0x1] sm:$0xff] %v1228
    %v1236 = vld [vmem:[#allocation3] sm:$0xff]
    %v1237 = vld [vmem:[#allocation3 + $0x1] sm:$0xff]
    %v1238 = vld [vmem:[#allocation3 + $0x2] sm:$0xff]
    %v1239 = vld [vmem:[%s1234] sm:$0xff]
    %v1240 = vld [vmem:[%s1234 + $0x1] sm:$0xff]
    %v1241 = vld [vmem:[%s1234 + $0x2] sm:$0xff]
    %v1242 = vpack.c.bf16 %v1239, %v1236
    %v1243 = vpack.c.bf16 %v1240, %v1237
    %v1244 = vpack.c.bf16 %v1241, %v1238
    %v1245 = vld [vmem:[#allocation10] sm:$0xf]
    %v1246 = vld [vmem:[#allocation10 + $0x4] sm:$0xf]
    %v1247 = vld [vmem:[#allocation10 + $0x8] sm:$0xf]
    %v1248 = vld [vmem:[#allocation10 + $0xc] sm:$0xf]
    %v1249 = vld [vmem:[#allocation10 + $0x10] sm:$0xf]
    %v1250 = vld [vmem:[#allocation10 + $0x14] sm:$0xf]
    %v1251 = vld [vmem:[#allocation10 + $0x18] sm:$0xf]
    %v1252 = vld [vmem:[#allocation10 + $0x1c] sm:$0xf]
    %v1253 = vld [vmem:[#allocation10 + $0x20] sm:$0xf]
    %v1254 = vld [vmem:[#allocation10 + $0x24] sm:$0xf]
    %v1255 = vld [vmem:[#allocation10 + $0x28] sm:$0xf]
    %v1256 = vld [vmem:[#allocation10 + $0x2c] sm:$0xf]
    %v1257 = vld [vmem:[#allocation10 + $0x30] sm:$0xf]
    %v1258 = vld [vmem:[#allocation10 + $0x34] sm:$0xf]
    %v1259 = vld [vmem:[#allocation10 + $0x38] sm:$0xf]
    %v1260 = vld [vmem:[#allocation10 + $0x3c] sm:$0xf]
    %v1261 = vld [vmem:[#allocation10 + $0x40] sm:$0xf]
    %v1262 = vld [vmem:[#allocation10 + $0x44] sm:$0xf]
    %v1263 = vld [vmem:[#allocation10 + $0x48] sm:$0xf]
    %v1264 = vld [vmem:[#allocation10 + $0x4c] sm:$0xf]
    %v1265 = vld [vmem:[#allocation10 + $0x50] sm:$0xf]
    %v1266 = vld [vmem:[#allocation10 + $0x54] sm:$0xf]
    %v1267 = vld [vmem:[#allocation10 + $0x58] sm:$0xf]
    %v1268 = vld [vmem:[#allocation10 + $0x5c] sm:$0xf]
    %v1269 = vld [vmem:[#allocation10 + $0x60] sm:$0xf]
    %v1270 = vld [vmem:[#allocation10 + $0x64] sm:$0xf]
    %v1271 = vld [vmem:[#allocation10 + $0x68] sm:$0xf]
    %v1272 = vld [vmem:[#allocation10 + $0x6c] sm:$0xf]
    %v1273 = vld [vmem:[#allocation10 + $0x70] sm:$0xf]
    %v1274 = vld [vmem:[#allocation10 + $0x74] sm:$0xf]
    %v1275 = vld [vmem:[#allocation10 + $0x78] sm:$0xf]
    %v1276 = vld [vmem:[#allocation10 + $0x7c] sm:$0xf]
    %v1277 = vld [vmem:[#allocation10 + $0x80] sm:$0xf]
    %v1278 = vld [vmem:[#allocation10 + $0x84] sm:$0xf]
    %v1279 = vld [vmem:[#allocation10 + $0x88] sm:$0xf]
    %v1280 = vld [vmem:[#allocation10 + $0x8c] sm:$0xf]
    %v1281 = vld [vmem:[#allocation10 + $0x90] sm:$0xf]
    %v1282 = vld [vmem:[#allocation10 + $0x94] sm:$0xf]
    %v1283 = vld [vmem:[#allocation10 + $0x98] sm:$0xf]
    %v1284 = vld [vmem:[#allocation10 + $0x9c] sm:$0xf]
    %v1285 = vld [vmem:[#allocation10 + $0xa0] sm:$0xf]
    %v1286 = vld [vmem:[#allocation10 + $0xa4] sm:$0xf]
    %v1287 = vld [vmem:[#allocation10 + $0xa8] sm:$0xf]
    %v1288 = vld [vmem:[#allocation10 + $0xac] sm:$0xf]
    %v1289 = vld [vmem:[#allocation10 + $0xb0] sm:$0xf]
    %v1290 = vld [vmem:[#allocation10 + $0xb4] sm:$0xf]
    %v1291 = vld [vmem:[#allocation10 + $0xb8] sm:$0xf]
    %v1292 = vld [vmem:[#allocation10 + $0xbc] sm:$0xf]
    %v1341 = vunpack.c.l.b16 %v1245
    %v1342 = vunpack.c.l.b16 %v1246
    %v1343 = vunpack.c.l.b16 %v1247
    %v1344 = vunpack.c.l.b16 %v1248
    %v1345 = vunpack.c.l.b16 %v1249
    %v1346 = vunpack.c.l.b16 %v1250
    %v1347 = vunpack.c.l.b16 %v1251
    %v1348 = vunpack.c.l.b16 %v1252
    %v1349 = vunpack.c.l.b16 %v1253
    %v1350 = vunpack.c.l.b16 %v1254
    %v1351 = vunpack.c.l.b16 %v1255
    %v1352 = vunpack.c.l.b16 %v1256
    %v1353 = vunpack.c.l.b16 %v1257
    %v1354 = vunpack.c.l.b16 %v1258
    %v1355 = vunpack.c.l.b16 %v1259
    %v1356 = vunpack.c.l.b16 %v1260
    %v1357 = vunpack.c.l.b16 %v1261
    %v1358 = vunpack.c.l.b16 %v1262
    %v1359 = vunpack.c.l.b16 %v1263
    %v1360 = vunpack.c.l.b16 %v1264
    %v1361 = vunpack.c.l.b16 %v1265
    %v1362 = vunpack.c.l.b16 %v1266
    %v1363 = vunpack.c.l.b16 %v1267
    %v1364 = vunpack.c.l.b16 %v1268
    %v1365 = vunpack.c.l.b16 %v1269
    %v1366 = vunpack.c.l.b16 %v1270
    %v1367 = vunpack.c.l.b16 %v1271
    %v1368 = vunpack.c.l.b16 %v1272
    %v1369 = vunpack.c.l.b16 %v1273
    %v1370 = vunpack.c.l.b16 %v1274
    %v1371 = vunpack.c.l.b16 %v1275
    %v1372 = vunpack.c.l.b16 %v1276
    %v1373 = vunpack.c.l.b16 %v1277
    %v1374 = vunpack.c.l.b16 %v1278
    %v1375 = vunpack.c.l.b16 %v1279
    %v1376 = vunpack.c.l.b16 %v1280
    %v1377 = vunpack.c.l.b16 %v1281
    %v1378 = vunpack.c.l.b16 %v1282
    %v1379 = vunpack.c.l.b16 %v1283
    %v1380 = vunpack.c.l.b16 %v1284
    %v1381 = vunpack.c.l.b16 %v1285
    %v1382 = vunpack.c.l.b16 %v1286
    %v1383 = vunpack.c.l.b16 %v1287
    %v1384 = vunpack.c.l.b16 %v1288
    %v1385 = vunpack.c.l.b16 %v1289
    %v1386 = vunpack.c.l.b16 %v1290
    %v1387 = vunpack.c.l.b16 %v1291
    %v1388 = vunpack.c.l.b16 %v1292
    %v1389 = vpack.c.b16 %v1342, %v1341
    %v1390 = vpack.c.b16 %v1344, %v1343
    %v1391 = vpack.c.b16 %v1346, %v1345
    %v1392 = vpack.c.b16 %v1348, %v1347
    %v1393 = vpack.c.b16 %v1350, %v1349
    %v1394 = vpack.c.b16 %v1352, %v1351
    %v1395 = vpack.c.b16 %v1354, %v1353
    %v1396 = vpack.c.b16 %v1356, %v1355
    %v1397 = vpack.c.b16 %v1358, %v1357
    %v1398 = vpack.c.b16 %v1360, %v1359
    %v1399 = vpack.c.b16 %v1362, %v1361
    %v1400 = vpack.c.b16 %v1364, %v1363
    %v1401 = vpack.c.b16 %v1366, %v1365
    %v1402 = vpack.c.b16 %v1368, %v1367
    %v1403 = vpack.c.b16 %v1370, %v1369
    %v1404 = vpack.c.b16 %v1372, %v1371
    %v1405 = vpack.c.b16 %v1374, %v1373
    %v1406 = vpack.c.b16 %v1376, %v1375
    %v1407 = vpack.c.b16 %v1378, %v1377
    %v1408 = vpack.c.b16 %v1380, %v1379
    %v1409 = vpack.c.b16 %v1382, %v1381
    %v1410 = vpack.c.b16 %v1384, %v1383
    %v1411 = vpack.c.b16 %v1386, %v1385
    %v1412 = vpack.c.b16 %v1388, %v1387
    %1437 = vmatpush.bf16.msra.mxu0 %v1396
    %1438 = vmatpush.bf16.msra.mxu0 %v1395
    %1439 = vmatpush.bf16.msra.mxu0 %v1394
    %1440 = vmatpush.bf16.msra.mxu0 %v1393
    %1441 = vmatpush.bf16.msra.mxu0 %v1392
    %1442 = vmatpush.bf16.msra.mxu0 %v1391
    %1443 = vmatpush.bf16.msra.mxu0 %v1390
    %1444 = vmatpush.bf16.msra.mxu0 %v1389
    %1445 = vmatmul.bf16.gmra.mxu0 %v1242
    %v1446 = vpop.f32.mrf.mxu0
    %v1447 = vadd.f32 0.0, %v1446
    %v1448 = vpop.f32.mrf.mxu0
    %v1449 = vadd.f32 0.0, %v1448
    %1450 = vdwg.mxu0
    %1451 = vmatpush.bf16.msra.mxu0 %v1404
    %1452 = vmatpush.bf16.msra.mxu0 %v1403
    %1453 = vmatpush.bf16.msra.mxu0 %v1402
    %1454 = vmatpush.bf16.msra.mxu0 %v1401
    %1455 = vmatpush.bf16.msra.mxu0 %v1400
    %1456 = vmatpush.bf16.msra.mxu0 %v1399
    %1457 = vmatpush.bf16.msra.mxu0 %v1398
    %1458 = vmatpush.bf16.msra.mxu0 %v1397
    %1459 = vmatmul.bf16.gmra.mxu0 %v1243
    %v1460 = vpop.f32.mrf.mxu0
    %v1461 = vadd.f32 %v1447, %v1460
    %v1462 = vpop.f32.mrf.mxu0
    %v1463 = vadd.f32 %v1449, %v1462
    %1464 = vdwg.mxu0
    %1465 = vmatpush.bf16.msra.mxu0 %v1412
    %1466 = vmatpush.bf16.msra.mxu0 %v1411
    %1467 = vmatpush.bf16.msra.mxu0 %v1410
    %1468 = vmatpush.bf16.msra.mxu0 %v1409
    %1469 = vmatpush.bf16.msra.mxu0 %v1408
    %1470 = vmatpush.bf16.msra.mxu0 %v1407
    %1471 = vmatpush.bf16.msra.mxu0 %v1406
    %1472 = vmatpush.bf16.msra.mxu0 %v1405
    %1473 = vmatmul.bf16.gmra.mxu0 %v1244
    %v1474 = vpop.f32.mrf.mxu0
    %v1475 = vadd.f32 %v1461, %v1474
    %v1476 = vpop.f32.mrf.mxu0
    %v1477 = vadd.f32 %v1463, %v1476
    %1478 = vdwg.mxu0
    %v1479 = vadd.f32 %v1475, %v1477
    %v1480 = vrot.slane %v1479, 4
    %v1481 = vadd.f32 %v1479, %v1480
    %v1482 = vrot.slane %v1481, 2
    %v1483 = vadd.f32 %v1481, %v1482
    %v1484 = vrot.slane %v1483, 1
    %v1485 = vadd.f32 %v1483, %v1484
    %v1486 = vmul.f32 %v1485, 0.0625
    %v1487 = vmul.f32 %v1475, %v1475
    %v1488 = vmul.f32 %v1477, %v1477
    %v1489 = vadd.f32 %v1487, %v1488
    %v1490 = vrot.slane %v1489, 4
    %v1491 = vadd.f32 %v1489, %v1490
    %v1492 = vrot.slane %v1491, 2
    %v1493 = vadd.f32 %v1491, %v1492
    %v1494 = vrot.slane %v1493, 1
    %v1495 = vadd.f32 %v1493, %v1494
    %v1496 = vmul.f32 %v1495, 0.0625
    %v1497 = vmul.f32 %v1486, %v1486
    %v1498 = vsub.f32 %v1496, %v1497
    %v1499 = vld [vmem:[%s8] sm:$0x1]
    %v1500 = vadd.f32 %v1498, 1e-05
    %v1501 = vrsqrt.pop %v1500
    %v1502 = vmul.f32 %v1501, %v1500
    %v1503 = vmul.f32 %v1502, %v1501
    %v1504 = vmul.f32 0.5, %v1503
    %v1505 = vsub.f32 1.5, %v1504
    %v1506 = vmul.f32 %v1501, %v1505
    %vm1507 = vweird.f32 %v1500
    %vm1508 = vweird.f32 %v1501
    %vm1509 = vmor %vm1507, %vm1508
    %v1510 = vsel %vm1509, %v1501, %v1506
    %v1511 = vmul.f32 %v1499, %v1510
    %v1512 = vld [vmem:[%s9] sm:$0x1]
    %v1513 = vmul.f32 %v1486, %v1511
    %v1514 = vsub.f32 %v1512, %v1513
    %v1516 = vperm.slane %v1511, 0
    %v1518 = vmul.f32 %v1475, %v1516
    %v1519 = vmul.f32 %v1477, %v1516
    %v1521 = vperm.slane %v1514, 0
    %v1523 = vadd.f32 %v1518, %v1521
    %v1524 = vadd.f32 %v1519, %v1521
    %v1525 = vmax.f32 %v1523, 0.0
    %v1526 = vmax.f32 %v1524, 0.0
    %1527 = vst [vmem:[#allocation4] sm:$0xff] 0.0
    %1528 = vst [vmem:[#allocation4 + $0x8] sm:$0x3] 0.0
    %1529 = vst [vmem:[#allocation4 + $0x10] sm:$0xff] 0.0
    %1530 = vst [vmem:[#allocation4 + $0x18] sm:$0x3] 0.0
    %1531 = vst [vmem:[#allocation4 + $0x1] sm:$0xff] %v1525
    %s1532 = scalar_lea.vmem [#allocation4], 16
    %1533 = vst [vmem:[%s1532 + $0x1] sm:$0xff] %v1526
    %v1534 = vld [vmem:[#allocation4] sm:$0xff]
    %v1535 = vld [vmem:[#allocation4 + $0x1] sm:$0xff]
    %v1536 = vld [vmem:[#allocation4 + $0x2] sm:$0xff]
    %v1537 = vld [vmem:[%s1532] sm:$0xff]
    %v1538 = vld [vmem:[%s1532 + $0x1] sm:$0xff]
    %v1539 = vld [vmem:[%s1532 + $0x2] sm:$0xff]
    %v1540 = vpack.c.bf16 %v1537, %v1534
    %v1541 = vpack.c.bf16 %v1538, %v1535
    %v1542 = vpack.c.bf16 %v1539, %v1536
    %v1543 = vld [vmem:[#allocation11] sm:$0xf]
    %v1544 = vld [vmem:[#allocation11 + $0x4] sm:$0xf]
    %v1545 = vld [vmem:[#allocation11 + $0x8] sm:$0xf]
    %v1546 = vld [vmem:[#allocation11 + $0xc] sm:$0xf]
    %v1547 = vld [vmem:[#allocation11 + $0x10] sm:$0xf]
    %v1548 = vld [vmem:[#allocation11 + $0x14] sm:$0xf]
    %v1549 = vld [vmem:[#allocation11 + $0x18] sm:$0xf]
    %v1550 = vld [vmem:[#allocation11 + $0x1c] sm:$0xf]
    %v1551 = vld [vmem:[#allocation11 + $0x20] sm:$0xf]
    %v1552 = vld [vmem:[#allocation11 + $0x24] sm:$0xf]
    %v1553 = vld [vmem:[#allocation11 + $0x28] sm:$0xf]
    %v1554 = vld [vmem:[#allocation11 + $0x2c] sm:$0xf]
    %v1555 = vld [vmem:[#allocation11 + $0x30] sm:$0xf]
    %v1556 = vld [vmem:[#allocation11 + $0x34] sm:$0xf]
    %v1557 = vld [vmem:[#allocation11 + $0x38] sm:$0xf]
    %v1558 = vld [vmem:[#allocation11 + $0x3c] sm:$0xf]
    %v1559 = vld [vmem:[#allocation11 + $0x40] sm:$0xf]
    %v1560 = vld [vmem:[#allocation11 + $0x44] sm:$0xf]
    %v1561 = vld [vmem:[#allocation11 + $0x48] sm:$0xf]
    %v1562 = vld [vmem:[#allocation11 + $0x4c] sm:$0xf]
    %v1563 = vld [vmem:[#allocation11 + $0x50] sm:$0xf]
    %v1564 = vld [vmem:[#allocation11 + $0x54] sm:$0xf]
    %v1565 = vld [vmem:[#allocation11 + $0x58] sm:$0xf]
    %v1566 = vld [vmem:[#allocation11 + $0x5c] sm:$0xf]
    %v1567 = vld [vmem:[#allocation11 + $0x60] sm:$0xf]
    %v1568 = vld [vmem:[#allocation11 + $0x64] sm:$0xf]
    %v1569 = vld [vmem:[#allocation11 + $0x68] sm:$0xf]
    %v1570 = vld [vmem:[#allocation11 + $0x6c] sm:$0xf]
    %v1571 = vld [vmem:[#allocation11 + $0x70] sm:$0xf]
    %v1572 = vld [vmem:[#allocation11 + $0x74] sm:$0xf]
    %v1573 = vld [vmem:[#allocation11 + $0x78] sm:$0xf]
    %v1574 = vld [vmem:[#allocation11 + $0x7c] sm:$0xf]
    %v1575 = vld [vmem:[#allocation11 + $0x80] sm:$0xf]
    %v1576 = vld [vmem:[#allocation11 + $0x84] sm:$0xf]
    %v1577 = vld [vmem:[#allocation11 + $0x88] sm:$0xf]
    %v1578 = vld [vmem:[#allocation11 + $0x8c] sm:$0xf]
    %v1579 = vld [vmem:[#allocation11 + $0x90] sm:$0xf]
    %v1580 = vld [vmem:[#allocation11 + $0x94] sm:$0xf]
    %v1581 = vld [vmem:[#allocation11 + $0x98] sm:$0xf]
    %v1582 = vld [vmem:[#allocation11 + $0x9c] sm:$0xf]
    %v1583 = vld [vmem:[#allocation11 + $0xa0] sm:$0xf]
    %v1584 = vld [vmem:[#allocation11 + $0xa4] sm:$0xf]
    %v1585 = vld [vmem:[#allocation11 + $0xa8] sm:$0xf]
    %v1586 = vld [vmem:[#allocation11 + $0xac] sm:$0xf]
    %v1587 = vld [vmem:[#allocation11 + $0xb0] sm:$0xf]
    %v1588 = vld [vmem:[#allocation11 + $0xb4] sm:$0xf]
    %v1589 = vld [vmem:[#allocation11 + $0xb8] sm:$0xf]
    %v1590 = vld [vmem:[#allocation11 + $0xbc] sm:$0xf]
    %v1639 = vunpack.c.l.b16 %v1543
    %v1640 = vunpack.c.l.b16 %v1544
    %v1641 = vunpack.c.l.b16 %v1545
    %v1642 = vunpack.c.l.b16 %v1546
    %v1643 = vunpack.c.l.b16 %v1547
    %v1644 = vunpack.c.l.b16 %v1548
    %v1645 = vunpack.c.l.b16 %v1549
    %v1646 = vunpack.c.l.b16 %v1550
    %v1647 = vunpack.c.l.b16 %v1551
    %v1648 = vunpack.c.l.b16 %v1552
    %v1649 = vunpack.c.l.b16 %v1553
    %v1650 = vunpack.c.l.b16 %v1554
    %v1651 = vunpack.c.l.b16 %v1555
    %v1652 = vunpack.c.l.b16 %v1556
    %v1653 = vunpack.c.l.b16 %v1557
    %v1654 = vunpack.c.l.b16 %v1558
    %v1655 = vunpack.c.l.b16 %v1559
    %v1656 = vunpack.c.l.b16 %v1560
    %v1657 = vunpack.c.l.b16 %v1561
    %v1658 = vunpack.c.l.b16 %v1562
    %v1659 = vunpack.c.l.b16 %v1563
    %v1660 = vunpack.c.l.b16 %v1564
    %v1661 = vunpack.c.l.b16 %v1565
    %v1662 = vunpack.c.l.b16 %v1566
    %v1663 = vunpack.c.l.b16 %v1567
    %v1664 = vunpack.c.l.b16 %v1568
    %v1665 = vunpack.c.l.b16 %v1569
    %v1666 = vunpack.c.l.b16 %v1570
    %v1667 = vunpack.c.l.b16 %v1571
    %v1668 = vunpack.c.l.b16 %v1572
    %v1669 = vunpack.c.l.b16 %v1573
    %v1670 = vunpack.c.l.b16 %v1574
    %v1671 = vunpack.c.l.b16 %v1575
    %v1672 = vunpack.c.l.b16 %v1576
    %v1673 = vunpack.c.l.b16 %v1577
    %v1674 = vunpack.c.l.b16 %v1578
    %v1675 = vunpack.c.l.b16 %v1579
    %v1676 = vunpack.c.l.b16 %v1580
    %v1677 = vunpack.c.l.b16 %v1581
    %v1678 = vunpack.c.l.b16 %v1582
    %v1679 = vunpack.c.l.b16 %v1583
    %v1680 = vunpack.c.l.b16 %v1584
    %v1681 = vunpack.c.l.b16 %v1585
    %v1682 = vunpack.c.l.b16 %v1586
    %v1683 = vunpack.c.l.b16 %v1587
    %v1684 = vunpack.c.l.b16 %v1588
    %v1685 = vunpack.c.l.b16 %v1589
    %v1686 = vunpack.c.l.b16 %v1590
    %v1687 = vpack.c.b16 %v1640, %v1639
    %v1688 = vpack.c.b16 %v1642, %v1641
    %v1689 = vpack.c.b16 %v1644, %v1643
    %v1690 = vpack.c.b16 %v1646, %v1645
    %v1691 = vpack.c.b16 %v1648, %v1647
    %v1692 = vpack.c.b16 %v1650, %v1649
    %v1693 = vpack.c.b16 %v1652, %v1651
    %v1694 = vpack.c.b16 %v1654, %v1653
    %v1695 = vpack.c.b16 %v1656, %v1655
    %v1696 = vpack.c.b16 %v1658, %v1657
    %v1697 = vpack.c.b16 %v1660, %v1659
    %v1698 = vpack.c.b16 %v1662, %v1661
    %v1699 = vpack.c.b16 %v1664, %v1663
    %v1700 = vpack.c.b16 %v1666, %v1665
    %v1701 = vpack.c.b16 %v1668, %v1667
    %v1702 = vpack.c.b16 %v1670, %v1669
    %v1703 = vpack.c.b16 %v1672, %v1671
    %v1704 = vpack.c.b16 %v1674, %v1673
    %v1705 = vpack.c.b16 %v1676, %v1675
    %v1706 = vpack.c.b16 %v1678, %v1677
    %v1707 = vpack.c.b16 %v1680, %v1679
    %v1708 = vpack.c.b16 %v1682, %v1681
    %v1709 = vpack.c.b16 %v1684, %v1683
    %v1710 = vpack.c.b16 %v1686, %v1685
    %1735 = vmatpush.bf16.msra.mxu0 %v1694
    %1736 = vmatpush.bf16.msra.mxu0 %v1693
    %1737 = vmatpush.bf16.msra.mxu0 %v1692
    %1738 = vmatpush.bf16.msra.mxu0 %v1691
    %1739 = vmatpush.bf16.msra.mxu0 %v1690
    %1740 = vmatpush.bf16.msra.mxu0 %v1689
    %1741 = vmatpush.bf16.msra.mxu0 %v1688
    %1742 = vmatpush.bf16.msra.mxu0 %v1687
    %1743 = vmatmul.bf16.gmra.mxu0 %v1540
    %v1744 = vpop.f32.mrf.mxu0
    %v1745 = vadd.f32 0.0, %v1744
    %v1746 = vpop.f32.mrf.mxu0
    %v1747 = vadd.f32 0.0, %v1746
    %1748 = vdwg.mxu0
    %1749 = vmatpush.bf16.msra.mxu0 %v1702
    %1750 = vmatpush.bf16.msra.mxu0 %v1701
    %1751 = vmatpush.bf16.msra.mxu0 %v1700
    %1752 = vmatpush.bf16.msra.mxu0 %v1699
    %1753 = vmatpush.bf16.msra.mxu0 %v1698
    %1754 = vmatpush.bf16.msra.mxu0 %v1697
    %1755 = vmatpush.bf16.msra.mxu0 %v1696
    %1756 = vmatpush.bf16.msra.mxu0 %v1695
    %1757 = vmatmul.bf16.gmra.mxu0 %v1541
    %v1758 = vpop.f32.mrf.mxu0
    %v1759 = vadd.f32 %v1745, %v1758
    %v1760 = vpop.f32.mrf.mxu0
    %v1761 = vadd.f32 %v1747, %v1760
    %1762 = vdwg.mxu0
    %1763 = vmatpush.bf16.msra.mxu0 %v1710
    %1764 = vmatpush.bf16.msra.mxu0 %v1709
    %1765 = vmatpush.bf16.msra.mxu0 %v1708
    %1766 = vmatpush.bf16.msra.mxu0 %v1707
    %1767 = vmatpush.bf16.msra.mxu0 %v1706
    %1768 = vmatpush.bf16.msra.mxu0 %v1705
    %1769 = vmatpush.bf16.msra.mxu0 %v1704
    %1770 = vmatpush.bf16.msra.mxu0 %v1703
    %1771 = vmatmul.bf16.gmra.mxu0 %v1542
    %v1772 = vpop.f32.mrf.mxu0
    %v1773 = vadd.f32 %v1759, %v1772
    %v1774 = vpop.f32.mrf.mxu0
    %v1775 = vadd.f32 %v1761, %v1774
    %1776 = vdwg.mxu0
    %v1777 = vadd.f32 %v1773, %v1775
    %v1778 = vrot.slane %v1777, 4
    %v1779 = vadd.f32 %v1777, %v1778
    %v1780 = vrot.slane %v1779, 2
    %v1781 = vadd.f32 %v1779, %v1780
    %v1782 = vrot.slane %v1781, 1
    %v1783 = vadd.f32 %v1781, %v1782
    %v1784 = vmul.f32 %v1783, 0.0625
    %v1785 = vmul.f32 %v1773, %v1773
    %v1786 = vmul.f32 %v1775, %v1775
    %v1787 = vadd.f32 %v1785, %v1786
    %v1788 = vrot.slane %v1787, 4
    %v1789 = vadd.f32 %v1787, %v1788
    %v1790 = vrot.slane %v1789, 2
    %v1791 = vadd.f32 %v1789, %v1790
    %v1792 = vrot.slane %v1791, 1
    %v1793 = vadd.f32 %v1791, %v1792
    %v1794 = vmul.f32 %v1793, 0.0625
    %v1795 = vmul.f32 %v1784, %v1784
    %v1796 = vsub.f32 %v1794, %v1795
    %v1797 = vld [vmem:[%s11] sm:$0x1]
    %v1798 = vadd.f32 %v1796, 1e-05
    %v1799 = vrsqrt.pop %v1798
    %v1800 = vmul.f32 %v1799, %v1798
    %v1801 = vmul.f32 %v1800, %v1799
    %v1802 = vmul.f32 0.5, %v1801
    %v1803 = vsub.f32 1.5, %v1802
    %v1804 = vmul.f32 %v1799, %v1803
    %vm1805 = vweird.f32 %v1798
    %vm1806 = vweird.f32 %v1799
    %vm1807 = vmor %vm1805, %vm1806
    %v1808 = vsel %vm1807, %v1799, %v1804
    %v1809 = vmul.f32 %v1797, %v1808
    %v1810 = vld [vmem:[%s12] sm:$0x1]
    %v1811 = vmul.f32 %v1784, %v1809
    %v1812 = vsub.f32 %v1810, %v1811
    %v1814 = vperm.slane %v1809, 0
    %v1816 = vmul.f32 %v1773, %v1814
    %v1817 = vmul.f32 %v1775, %v1814
    %v1819 = vperm.slane %v1812, 0
    %v1821 = vadd.f32 %v1816, %v1819
    %v1822 = vadd.f32 %v1817, %v1819
    %v1823 = vmax.f32 %v1821, 0.0
    %v1824 = vmax.f32 %v1822, 0.0
    %1825 = vst [vmem:[#allocation5] sm:$0xff] 0.0
    %1826 = vst [vmem:[#allocation5 + $0x8] sm:$0x3f] 0.0
    %1827 = vst [vmem:[#allocation5 + $0x10] sm:$0xff] 0.0
    %1828 = vst [vmem:[#allocation5 + $0x18] sm:$0x3f] 0.0
    %1829 = vst [vmem:[#allocation5 + $0x3] sm:$0xff] %v1823
    %s1830 = scalar_lea.vmem [#allocation5], 16
    %1831 = vst [vmem:[%s1830 + $0x3] sm:$0xff] %v1824
    %v1832 = vld [vmem:[#allocation5] sm:$0xff]
    %v1833 = vld [vmem:[#allocation5 + $0x8] sm:$0x7]
    %v1834 = vld [vmem:[#allocation5 + $0x1] sm:$0xff]
    %v1835 = vld [vmem:[#allocation5 + $0x9] sm:$0x7]
    %v1836 = vld [vmem:[#allocation5 + $0x2] sm:$0xff]
    %v1837 = vld [vmem:[#allocation5 + $0xa] sm:$0x7]
    %v1838 = vld [vmem:[#allocation5 + $0x3] sm:$0xff]
    %v1839 = vld [vmem:[#allocation5 + $0xb] sm:$0x7]
    %v1840 = vld [vmem:[%s1830] sm:$0xff]
    %v1841 = vld [vmem:[%s1830 + $0x8] sm:$0x7]
    %v1842 = vld [vmem:[%s1830 + $0x1] sm:$0xff]
    %v1843 = vld [vmem:[%s1830 + $0x9] sm:$0x7]
    %v1844 = vld [vmem:[%s1830 + $0x2] sm:$0xff]
    %v1845 = vld [vmem:[%s1830 + $0xa] sm:$0x7]
    %v1846 = vld [vmem:[%s1830 + $0x3] sm:$0xff]
    %v1847 = vld [vmem:[%s1830 + $0xb] sm:$0x7]
    %vm1856 = vcmask 1042432
    %v1857 = vrot.slane %v1840, 5
    %v1858 = vrot.slane %v1842, 5
    %v1859 = vrot.slane %v1844, 5
    %v1860 = vrot.slane %v1846, 5
    %v1861 = vrot.slane %v1841, 5
    %v1862 = vsel %vm1856, %v1857, %v1861
    %v1863 = vrot.slane %v1843, 5
    %v1864 = vsel %vm1856, %v1858, %v1863
    %v1865 = vrot.slane %v1845, 5
    %v1866 = vsel %vm1856, %v1859, %v1865
    %v1867 = vrot.slane %v1847, 5
    %v1868 = vsel %vm1856, %v1860, %v1867
    %v1877 = vsel %vm1856, %v1833, %v1857
    %v1878 = vsel %vm1856, %v1835, %v1858
    %v1879 = vsel %vm1856, %v1837, %v1859
    %v1880 = vsel %vm1856, %v1839, %v1860
    %v1881 = vpack.c.bf16 %v1877, %v1832
    %v1882 = vpack.c.bf16 %v1878, %v1834
    %v1883 = vpack.c.bf16 %v1879, %v1836
    %v1884 = vpack.c.bf16 %v1880, %v1838
    %v1885 = vpack.c.bf16 %v1862, %v1862
    %v1886 = vpack.c.bf16 %v1864, %v1864
    %v1887 = vpack.c.bf16 %v1866, %v1866
    %v1888 = vpack.c.bf16 %v1868, %v1868
    %v1889 = vld [vmem:[#allocation13] sm:$0xff]
    %v1890 = vld [vmem:[#allocation13 + $0x8] sm:$0xff]
    %v1891 = vld [vmem:[#allocation13 + $0x10] sm:$0xff]
    %v1892 = vld [vmem:[#allocation13 + $0x18] sm:$0xff]
    %v1893 = vld [vmem:[#allocation13 + $0x20] sm:$0xff]
    %v1894 = vld [vmem:[#allocation13 + $0x28] sm:$0xff]
    %v1895 = vld [vmem:[#allocation13 + $0x30] sm:$0xff]
    %v1896 = vld [vmem:[#allocation13 + $0x38] sm:$0xff]
    %v1897 = vld [vmem:[#allocation13 + $0x40] sm:$0xff]
    %v1898 = vld [vmem:[#allocation13 + $0x48] sm:$0xff]
    %v1899 = vld [vmem:[#allocation13 + $0x50] sm:$0xff]
    %v1900 = vld [vmem:[#allocation13 + $0x58] sm:$0xff]
    %v1901 = vld [vmem:[#allocation13 + $0x60] sm:$0xff]
    %v1902 = vld [vmem:[#allocation13 + $0x68] sm:$0xff]
    %v1903 = vld [vmem:[#allocation13 + $0x70] sm:$0xff]
    %v1904 = vld [vmem:[#allocation13 + $0x78] sm:$0xff]
    %v1905 = vld [vmem:[#allocation13 + $0x80] sm:$0xff]
    %v1906 = vld [vmem:[#allocation13 + $0x88] sm:$0xff]
    %v1907 = vld [vmem:[#allocation13 + $0x90] sm:$0xff]
    %v1908 = vld [vmem:[#allocation13 + $0x98] sm:$0xff]
    %v1909 = vld [vmem:[#allocation13 + $0xa0] sm:$0xff]
    %v1910 = vld [vmem:[#allocation13 + $0xa8] sm:$0xff]
    %v1911 = vld [vmem:[#allocation13 + $0xb0] sm:$0xff]
    %v1912 = vld [vmem:[#allocation13 + $0xb8] sm:$0xff]
    %v1913 = vld [vmem:[#allocation13 + $0xc0] sm:$0xff]
    %v1914 = vld [vmem:[#allocation13 + $0xc8] sm:$0xff]
    %v1915 = vld [vmem:[#allocation13 + $0xd0] sm:$0xff]
    %v1916 = vld [vmem:[#allocation13 + $0xd8] sm:$0xff]
    %v1917 = vld [vmem:[#allocation13 + $0xe0] sm:$0xff]
    %v1918 = vld [vmem:[#allocation13 + $0xe8] sm:$0xff]
    %v1919 = vld [vmem:[#allocation13 + $0xf0] sm:$0xff]
    %v1920 = vld [vmem:[#allocation13 + $0xf8] sm:$0xff]
    %v1921 = vld [vmem:[#allocation13 + $0x100] sm:$0xff]
    %v1922 = vld [vmem:[#allocation13 + $0x108] sm:$0xff]
    %v1923 = vld [vmem:[#allocation13 + $0x110] sm:$0xff]
    %v1924 = vld [vmem:[#allocation13 + $0x118] sm:$0xff]
    %v1925 = vld [vmem:[#allocation13 + $0x120] sm:$0xff]
    %v1926 = vld [vmem:[#allocation13 + $0x128] sm:$0xff]
    %v1927 = vld [vmem:[#allocation13 + $0x130] sm:$0xff]
    %v1928 = vld [vmem:[#allocation13 + $0x138] sm:$0xff]
    %v1929 = vld [vmem:[#allocation13 + $0x140] sm:$0xff]
    %v1930 = vld [vmem:[#allocation13 + $0x148] sm:$0xff]
    %v1931 = vld [vmem:[#allocation13 + $0x150] sm:$0xff]
    %v1932 = vld [vmem:[#allocation13 + $0x158] sm:$0xff]
    %v1933 = vld [vmem:[#allocation13 + $0x160] sm:$0xff]
    %v1934 = vld [vmem:[#allocation13 + $0x168] sm:$0xff]
    %v1935 = vld [vmem:[#allocation13 + $0x170] sm:$0xff]
    %v1936 = vld [vmem:[#allocation13 + $0x178] sm:$0xff]
    %v1937 = vld [vmem:[#allocation13 + $0x180] sm:$0xff]
    %v1938 = vld [vmem:[#allocation13 + $0x188] sm:$0xff]
    %v1939 = vld [vmem:[#allocation13 + $0x190] sm:$0xff]
    %v1940 = vld [vmem:[#allocation13 + $0x198] sm:$0xff]
    %v1941 = vld [vmem:[#allocation13 + $0x1a0] sm:$0xff]
    %v1942 = vld [vmem:[#allocation13 + $0x1a8] sm:$0xff]
    %v1943 = vld [vmem:[#allocation13 + $0x1b0] sm:$0xff]
    %v1944 = vld [vmem:[#allocation13 + $0x1b8] sm:$0xff]
    %v1945 = vld [vmem:[#allocation13 + $0x1c0] sm:$0xff]
    %v1946 = vld [vmem:[#allocation13 + $0x1c8] sm:$0xff]
    %v1947 = vld [vmem:[#allocation13 + $0x1d0] sm:$0xff]
    %v1948 = vld [vmem:[#allocation13 + $0x1d8] sm:$0xff]
    %v1949 = vld [vmem:[#allocation13 + $0x1e0] sm:$0xff]
    %v1950 = vld [vmem:[#allocation13 + $0x1e8] sm:$0xff]
    %v1951 = vld [vmem:[#allocation13 + $0x1f0] sm:$0xff]
    %v1952 = vld [vmem:[#allocation13 + $0x1f8] sm:$0xff]
    %v2017 = vunpack.c.l.b16 %v1889
    %v2018 = vunpack.c.h.b16 %v1889
    %v2019 = vunpack.c.l.b16 %v1890
    %v2020 = vunpack.c.h.b16 %v1890
    %v2021 = vunpack.c.l.b16 %v1891
    %v2022 = vunpack.c.h.b16 %v1891
    %v2023 = vunpack.c.l.b16 %v1892
    %v2024 = vunpack.c.h.b16 %v1892
    %v2025 = vunpack.c.l.b16 %v1893
    %v2026 = vunpack.c.h.b16 %v1893
    %v2027 = vunpack.c.l.b16 %v1894
    %v2028 = vunpack.c.h.b16 %v1894
    %v2029 = vunpack.c.l.b16 %v1895
    %v2030 = vunpack.c.h.b16 %v1895
    %v2031 = vunpack.c.l.b16 %v1896
    %v2032 = vunpack.c.h.b16 %v1896
    %v2033 = vunpack.c.l.b16 %v1897
    %v2034 = vunpack.c.h.b16 %v1897
    %v2035 = vunpack.c.l.b16 %v1898
    %v2036 = vunpack.c.h.b16 %v1898
    %v2037 = vunpack.c.l.b16 %v1899
    %v2038 = vunpack.c.h.b16 %v1899
    %v2039 = vunpack.c.l.b16 %v1900
    %v2040 = vunpack.c.h.b16 %v1900
    %v2041 = vunpack.c.l.b16 %v1901
    %v2042 = vunpack.c.h.b16 %v1901
    %v2043 = vunpack.c.l.b16 %v1902
    %v2044 = vunpack.c.h.b16 %v1902
    %v2045 = vunpack.c.l.b16 %v1903
    %v2046 = vunpack.c.h.b16 %v1903
    %v2047 = vunpack.c.l.b16 %v1904
    %v2048 = vunpack.c.h.b16 %v1904
    %v2049 = vunpack.c.l.b16 %v1905
    %v2050 = vunpack.c.h.b16 %v1905
    %v2051 = vunpack.c.l.b16 %v1906
    %v2052 = vunpack.c.h.b16 %v1906
    %v2053 = vunpack.c.l.b16 %v1907
    %v2054 = vunpack.c.h.b16 %v1907
    %v2055 = vunpack.c.l.b16 %v1908
    %v2056 = vunpack.c.h.b16 %v1908
    %v2057 = vunpack.c.l.b16 %v1909
    %v2058 = vunpack.c.h.b16 %v1909
    %v2059 = vunpack.c.l.b16 %v1910
    %v2060 = vunpack.c.h.b16 %v1910
    %v2061 = vunpack.c.l.b16 %v1911
    %v2062 = vunpack.c.h.b16 %v1911
    %v2063 = vunpack.c.l.b16 %v1912
    %v2064 = vunpack.c.h.b16 %v1912
    %v2065 = vunpack.c.l.b16 %v1913
    %v2066 = vunpack.c.h.b16 %v1913
    %v2067 = vunpack.c.l.b16 %v1914
    %v2068 = vunpack.c.h.b16 %v1914
    %v2069 = vunpack.c.l.b16 %v1915
    %v2070 = vunpack.c.h.b16 %v1915
    %v2071 = vunpack.c.l.b16 %v1916
    %v2072 = vunpack.c.h.b16 %v1916
    %v2073 = vunpack.c.l.b16 %v1917
    %v2074 = vunpack.c.h.b16 %v1917
    %v2075 = vunpack.c.l.b16 %v1918
    %v2076 = vunpack.c.h.b16 %v1918
    %v2077 = vunpack.c.l.b16 %v1919
    %v2078 = vunpack.c.h.b16 %v1919
    %v2079 = vunpack.c.l.b16 %v1920
    %v2080 = vunpack.c.h.b16 %v1920
    %v2081 = vunpack.c.l.b16 %v1921
    %v2082 = vunpack.c.h.b16 %v1921
    %v2083 = vunpack.c.l.b16 %v1922
    %v2084 = vunpack.c.h.b16 %v1922
    %v2085 = vunpack.c.l.b16 %v1923
    %v2086 = vunpack.c.h.b16 %v1923
    %v2087 = vunpack.c.l.b16 %v1924
    %v2088 = vunpack.c.h.b16 %v1924
    %v2089 = vunpack.c.l.b16 %v1925
    %v2090 = vunpack.c.h.b16 %v1925
    %v2091 = vunpack.c.l.b16 %v1926
    %v2092 = vunpack.c.h.b16 %v1926
    %v2093 = vunpack.c.l.b16 %v1927
    %v2094 = vunpack.c.h.b16 %v1927
    %v2095 = vunpack.c.l.b16 %v1928
    %v2096 = vunpack.c.h.b16 %v1928
    %v2097 = vunpack.c.l.b16 %v1929
    %v2098 = vunpack.c.h.b16 %v1929
    %v2099 = vunpack.c.l.b16 %v1930
    %v2100 = vunpack.c.h.b16 %v1930
    %v2101 = vunpack.c.l.b16 %v1931
    %v2102 = vunpack.c.h.b16 %v1931
    %v2103 = vunpack.c.l.b16 %v1932
    %v2104 = vunpack.c.h.b16 %v1932
    %v2105 = vunpack.c.l.b16 %v1933
    %v2106 = vunpack.c.h.b16 %v1933
    %v2107 = vunpack.c.l.b16 %v1934
    %v2108 = vunpack.c.h.b16 %v1934
    %v2109 = vunpack.c.l.b16 %v1935
    %v2110 = vunpack.c.h.b16 %v1935
    %v2111 = vunpack.c.l.b16 %v1936
    %v2112 = vunpack.c.h.b16 %v1936
    %v2113 = vunpack.c.l.b16 %v1937
    %v2114 = vunpack.c.h.b16 %v1937
    %v2115 = vunpack.c.l.b16 %v1938
    %v2116 = vunpack.c.h.b16 %v1938
    %v2117 = vunpack.c.l.b16 %v1939
    %v2118 = vunpack.c.h.b16 %v1939
    %v2119 = vunpack.c.l.b16 %v1940
    %v2120 = vunpack.c.h.b16 %v1940
    %v2121 = vunpack.c.l.b16 %v1941
    %v2122 = vunpack.c.h.b16 %v1941
    %v2123 = vunpack.c.l.b16 %v1942
    %v2124 = vunpack.c.h.b16 %v1942
    %v2125 = vunpack.c.l.b16 %v1943
    %v2126 = vunpack.c.h.b16 %v1943
    %v2127 = vunpack.c.l.b16 %v1944
    %v2128 = vunpack.c.h.b16 %v1944
    %v2129 = vunpack.c.l.b16 %v1945
    %v2130 = vunpack.c.h.b16 %v1945
    %v2131 = vunpack.c.l.b16 %v1946
    %v2132 = vunpack.c.h.b16 %v1946
    %v2133 = vunpack.c.l.b16 %v1947
    %v2134 = vunpack.c.h.b16 %v1947
    %v2135 = vunpack.c.l.b16 %v1948
    %v2136 = vunpack.c.h.b16 %v1948
    %v2137 = vunpack.c.l.b16 %v1949
    %v2138 = vunpack.c.h.b16 %v1949
    %v2139 = vunpack.c.l.b16 %v1950
    %v2140 = vunpack.c.h.b16 %v1950
    %v2141 = vunpack.c.l.b16 %v1951
    %v2142 = vunpack.c.h.b16 %v1951
    %v2143 = vunpack.c.l.b16 %v1952
    %v2144 = vunpack.c.h.b16 %v1952
    %v2145 = vpack.c.b16 %v2019, %v2017
    %v2146 = vpack.c.b16 %v2020, %v2018
    %v2147 = vpack.c.b16 %v2023, %v2021
    %v2148 = vpack.c.b16 %v2024, %v2022
    %v2149 = vpack.c.b16 %v2027, %v2025
    %v2150 = vpack.c.b16 %v2028, %v2026
    %v2151 = vpack.c.b16 %v2031, %v2029
    %v2152 = vpack.c.b16 %v2032, %v2030
    %v2153 = vpack.c.b16 %v2035, %v2033
    %v2154 = vpack.c.b16 %v2036, %v2034
    %v2155 = vpack.c.b16 %v2039, %v2037
    %v2156 = vpack.c.b16 %v2040, %v2038
    %v2157 = vpack.c.b16 %v2043, %v2041
    %v2158 = vpack.c.b16 %v2044, %v2042
    %v2159 = vpack.c.b16 %v2047, %v2045
    %v2160 = vpack.c.b16 %v2048, %v2046
    %v2161 = vpack.c.b16 %v2051, %v2049
    %v2162 = vpack.c.b16 %v2052, %v2050
    %v2163 = vpack.c.b16 %v2055, %v2053
    %v2164 = vpack.c.b16 %v2056, %v2054
    %v2165 = vpack.c.b16 %v2059, %v2057
    %v2166 = vpack.c.b16 %v2060, %v2058
    %v2167 = vpack.c.b16 %v2063, %v2061
    %v2168 = vpack.c.b16 %v2064, %v2062
    %v2169 = vpack.c.b16 %v2067, %v2065
    %v2170 = vpack.c.b16 %v2068, %v2066
    %v2171 = vpack.c.b16 %v2071, %v2069
    %v2172 = vpack.c.b16 %v2072, %v2070
    %v2173 = vpack.c.b16 %v2075, %v2073
    %v2174 = vpack.c.b16 %v2076, %v2074
    %v2175 = vpack.c.b16 %v2079, %v2077
    %v2176 = vpack.c.b16 %v2080, %v2078
    %v2177 = vpack.c.b16 %v2083, %v2081
    %v2178 = vpack.c.b16 %v2084, %v2082
    %v2179 = vpack.c.b16 %v2087, %v2085
    %v2180 = vpack.c.b16 %v2088, %v2086
    %v2181 = vpack.c.b16 %v2091, %v2089
    %v2182 = vpack.c.b16 %v2092, %v2090
    %v2183 = vpack.c.b16 %v2095, %v2093
    %v2184 = vpack.c.b16 %v2096, %v2094
    %v2185 = vpack.c.b16 %v2099, %v2097
    %v2186 = vpack.c.b16 %v2100, %v2098
    %v2187 = vpack.c.b16 %v2103, %v2101
    %v2188 = vpack.c.b16 %v2104, %v2102
    %v2189 = vpack.c.b16 %v2107, %v2105
    %v2190 = vpack.c.b16 %v2108, %v2106
    %v2191 = vpack.c.b16 %v2111, %v2109
    %v2192 = vpack.c.b16 %v2112, %v2110
    %v2193 = vpack.c.b16 %v2115, %v2113
    %v2194 = vpack.c.b16 %v2116, %v2114
    %v2195 = vpack.c.b16 %v2119, %v2117
    %v2196 = vpack.c.b16 %v2120, %v2118
    %v2197 = vpack.c.b16 %v2123, %v2121
    %v2198 = vpack.c.b16 %v2124, %v2122
    %v2199 = vpack.c.b16 %v2127, %v2125
    %v2200 = vpack.c.b16 %v2128, %v2126
    %v2201 = vpack.c.b16 %v2131, %v2129
    %v2202 = vpack.c.b16 %v2132, %v2130
    %v2203 = vpack.c.b16 %v2135, %v2133
    %v2204 = vpack.c.b16 %v2136, %v2134
    %v2205 = vpack.c.b16 %v2139, %v2137
    %v2206 = vpack.c.b16 %v2140, %v2138
    %v2207 = vpack.c.b16 %v2143, %v2141
    %v2208 = vpack.c.b16 %v2144, %v2142
    %2273 = vmatpush.bf16.msra.mxu0 %v2159
    %2274 = vmatpush.bf16.msra.mxu0 %v2157
    %2275 = vmatpush.bf16.msra.mxu0 %v2155
    %2276 = vmatpush.bf16.msra.mxu0 %v2153
    %2277 = vmatpush.bf16.msra.mxu0 %v2151
    %2278 = vmatpush.bf16.msra.mxu0 %v2149
    %2279 = vmatpush.bf16.msra.mxu0 %v2147
    %2280 = vmatpush.bf16.msra.mxu0 %v2145
    %2281 = vmatmul.bf16.gmra.mxu0 %v1881
    %v2282 = vpop.f32.mrf.mxu0
    %v2283 = vadd.f32 0.0, %v2282
    %v2284 = vpop.f32.mrf.mxu0
    %v2285 = vadd.f32 0.0, %v2284
    %2286 = vmatmul.bf16.gmra.mxu0 %v1885
    %v2287 = vpop.f32.mrf.mxu0
    %v2288 = vadd.f32 0.0, %v2287
    %v2289 = vpop.f32.mrf.mxu0
    %2290 = vdwg.mxu0
    %2291 = vmatpush.bf16.msra.mxu0 %v2175
    %2292 = vmatpush.bf16.msra.mxu0 %v2173
    %2293 = vmatpush.bf16.msra.mxu0 %v2171
    %2294 = vmatpush.bf16.msra.mxu0 %v2169
    %2295 = vmatpush.bf16.msra.mxu0 %v2167
    %2296 = vmatpush.bf16.msra.mxu0 %v2165
    %2297 = vmatpush.bf16.msra.mxu0 %v2163
    %2298 = vmatpush.bf16.msra.mxu0 %v2161
    %2299 = vmatmul.bf16.gmra.mxu0 %v1882
    %v2300 = vpop.f32.mrf.mxu0
    %v2301 = vadd.f32 %v2283, %v2300
    %v2302 = vpop.f32.mrf.mxu0
    %v2303 = vadd.f32 %v2285, %v2302
    %2304 = vmatmul.bf16.gmra.mxu0 %v1886
    %v2305 = vpop.f32.mrf.mxu0
    %v2306 = vadd.f32 %v2288, %v2305
    %v2307 = vpop.f32.mrf.mxu0
    %2308 = vdwg.mxu0
    %2309 = vmatpush.bf16.msra.mxu0 %v2191
    %2310 = vmatpush.bf16.msra.mxu0 %v2189
    %2311 = vmatpush.bf16.msra.mxu0 %v2187
    %2312 = vmatpush.bf16.msra.mxu0 %v2185
    %2313 = vmatpush.bf16.msra.mxu0 %v2183
    %2314 = vmatpush.bf16.msra.mxu0 %v2181
    %2315 = vmatpush.bf16.msra.mxu0 %v2179
    %2316 = vmatpush.bf16.msra.mxu0 %v2177
    %2317 = vmatmul.bf16.gmra.mxu0 %v1883
    %v2318 = vpop.f32.mrf.mxu0
    %v2319 = vadd.f32 %v2301, %v2318
    %v2320 = vpop.f32.mrf.mxu0
    %v2321 = vadd.f32 %v2303, %v2320
    %2322 = vmatmul.bf16.gmra.mxu0 %v1887
    %v2323 = vpop.f32.mrf.mxu0
    %v2324 = vadd.f32 %v2306, %v2323
    %v2325 = vpop.f32.mrf.mxu0
    %2326 = vdwg.mxu0
    %2327 = vmatpush.bf16.msra.mxu0 %v2207
    %2328 = vmatpush.bf16.msra.mxu0 %v2205
    %2329 = vmatpush.bf16.msra.mxu0 %v2203
    %2330 = vmatpush.bf16.msra.mxu0 %v2201
    %2331 = vmatpush.bf16.msra.mxu0 %v2199
    %2332 = vmatpush.bf16.msra.mxu0 %v2197
    %2333 = vmatpush.bf16.msra.mxu0 %v2195
    %2334 = vmatpush.bf16.msra.mxu0 %v2193
    %2335 = vmatmul.bf16.gmra.mxu0 %v1884
    %v2336 = vpop.f32.mrf.mxu0
    %v2337 = vadd.f32 %v2319, %v2336
    %v2338 = vpop.f32.mrf.mxu0
    %v2339 = vadd.f32 %v2321, %v2338
    %2340 = vmatmul.bf16.gmra.mxu0 %v1888
    %v2341 = vpop.f32.mrf.mxu0
    %v2342 = vadd.f32 %v2324, %v2341
    %v2343 = vpop.f32.mrf.mxu0
    %2344 = vdwg.mxu0
    %2345 = vmatpush.bf16.msra.mxu0 %v2160
    %2346 = vmatpush.bf16.msra.mxu0 %v2158
    %2347 = vmatpush.bf16.msra.mxu0 %v2156
    %2348 = vmatpush.bf16.msra.mxu0 %v2154
    %2349 = vmatpush.bf16.msra.mxu0 %v2152
    %2350 = vmatpush.bf16.msra.mxu0 %v2150
    %2351 = vmatpush.bf16.msra.mxu0 %v2148
    %2352 = vmatpush.bf16.msra.mxu0 %v2146
    %2353 = vmatmul.bf16.gmra.mxu0 %v1881
    %v2354 = vpop.f32.mrf.mxu0
    %v2355 = vadd.f32 0.0, %v2354
    %v2356 = vpop.f32.mrf.mxu0
    %v2357 = vadd.f32 0.0, %v2356
    %2358 = vmatmul.bf16.gmra.mxu0 %v1885
    %v2359 = vpop.f32.mrf.mxu0
    %v2360 = vadd.f32 0.0, %v2359
    %v2361 = vpop.f32.mrf.mxu0
    %2362 = vdwg.mxu0
    %2363 = vmatpush.bf16.msra.mxu0 %v2176
    %2364 = vmatpush.bf16.msra.mxu0 %v2174
    %2365 = vmatpush.bf16.msra.mxu0 %v2172
    %2366 = vmatpush.bf16.msra.mxu0 %v2170
    %2367 = vmatpush.bf16.msra.mxu0 %v2168
    %2368 = vmatpush.bf16.msra.mxu0 %v2166
    %2369 = vmatpush.bf16.msra.mxu0 %v2164
    %2370 = vmatpush.bf16.msra.mxu0 %v2162
    %2371 = vmatmul.bf16.gmra.mxu0 %v1882
    %v2372 = vpop.f32.mrf.mxu0
    %v2373 = vadd.f32 %v2355, %v2372
    %v2374 = vpop.f32.mrf.mxu0
    %v2375 = vadd.f32 %v2357, %v2374
    %2376 = vmatmul.bf16.gmra.mxu0 %v1886
    %v2377 = vpop.f32.mrf.mxu0
    %v2378 = vadd.f32 %v2360, %v2377
    %v2379 = vpop.f32.mrf.mxu0
    %2380 = vdwg.mxu0
    %2381 = vmatpush.bf16.msra.mxu0 %v2192
    %2382 = vmatpush.bf16.msra.mxu0 %v2190
    %2383 = vmatpush.bf16.msra.mxu0 %v2188
    %2384 = vmatpush.bf16.msra.mxu0 %v2186
    %2385 = vmatpush.bf16.msra.mxu0 %v2184
    %2386 = vmatpush.bf16.msra.mxu0 %v2182
    %2387 = vmatpush.bf16.msra.mxu0 %v2180
    %2388 = vmatpush.bf16.msra.mxu0 %v2178
    %2389 = vmatmul.bf16.gmra.mxu0 %v1883
    %v2390 = vpop.f32.mrf.mxu0
    %v2391 = vadd.f32 %v2373, %v2390
    %v2392 = vpop.f32.mrf.mxu0
    %v2393 = vadd.f32 %v2375, %v2392
    %2394 = vmatmul.bf16.gmra.mxu0 %v1887
    %v2395 = vpop.f32.mrf.mxu0
    %v2396 = vadd.f32 %v2378, %v2395
    %v2397 = vpop.f32.mrf.mxu0
    %2398 = vdwg.mxu0
    %2399 = vmatpush.bf16.msra.mxu0 %v2208
    %2400 = vmatpush.bf16.msra.mxu0 %v2206
    %2401 = vmatpush.bf16.msra.mxu0 %v2204
    %2402 = vmatpush.bf16.msra.mxu0 %v2202
    %2403 = vmatpush.bf16.msra.mxu0 %v2200
    %2404 = vmatpush.bf16.msra.mxu0 %v2198
    %2405 = vmatpush.bf16.msra.mxu0 %v2196
    %2406 = vmatpush.bf16.msra.mxu0 %v2194
    %2407 = vmatmul.bf16.gmra.mxu0 %v1884
    %v2408 = vpop.f32.mrf.mxu0
    %v2409 = vadd.f32 %v2391, %v2408
    %v2410 = vpop.f32.mrf.mxu0
    %v2411 = vadd.f32 %v2393, %v2410
    %2412 = vmatmul.bf16.gmra.mxu0 %v1888
    %v2413 = vpop.f32.mrf.mxu0
    %v2414 = vadd.f32 %v2396, %v2413
    %v2415 = vpop.f32.mrf.mxu0
    %2416 = vdwg.mxu0
    %v2417 = vtanh.pop %v2337
    %v2418 = vtanh.pop %v2409
    %v2419 = vtanh.pop %v2339
    %v2420 = vtanh.pop %v2411
    %v2421 = vtanh.pop %v2342
    %v2422 = vtanh.pop %v2414
    %2423 = vst [vmem:[%s14] sm:$0xff] %v2417
    %2424 = vst [vmem:[%s14 + $0x8] sm:$0xff] %v2418
    %2425 = vst [vmem:[%s14 + $0x10] sm:$0x7] %v2419
    %2426 = vst [vmem:[%s14 + $0x18] sm:$0x7] %v2420
    %vm2431 = vcmask 1044480
    %v2432 = vrot.slane %v2419, 3
    %v2433 = vrot.slane %v2421, 3
    %v2434 = vsel %vm2431, %v2432, %v2433
    %v2435 = vrot.slane %v2420, 3
    %v2436 = vrot.slane %v2422, 3
    %v2437 = vsel %vm2431, %v2435, %v2436
    %s2442 = scalar_lea.vmem %s14, 32
    %2443 = vst [vmem:[%s2442] sm:$0xff] %v2434
    %2444 = vst [vmem:[%s2442 + $0x8] sm:$0xff] %v2437
    %2445 = vst [vmem:[%s2442 + $0x10] sm:$0x7] %v2433
    %2446 = vst [vmem:[%s2442 + $0x18] sm:$0x7] %v2436
    // Predicated region
    $region78: #{generator_forward.1} parent=1 // pred_check
      _
    $region79: #{generator_forward.1} parent=1 // pred_check_branch
      %2448 = sbr.rel (0) target = $region81
    $region80: #{generator_forward.1} parent=1 // pred_region
      _
    $region81: #{generator_forward.1} parent=1 // pred_fallthru
      _
    // Predicated region
    $region82: #{generator_forward.1} parent=1 // pred_check
      _
    $region83: #{generator_forward.1} parent=1 // pred_check_branch
      %2450 = sbr.rel (0) target = $region85
    $region84: #{generator_forward.1} parent=1 // pred_region
      _
    $region85: #{generator_forward.1} parent=1 // pred_fallthru
      _
    %2451 = vsyncpa [#allocation7], 1
    %2452 = vsyncpa [#allocation9], 1
    %2453 = vsyncpa [#allocation12], 1

</llo_original>
